<compile_context>
chip_gen: v7x
topology: tpu7x:2x2x1
jax: 0.10.0
libtpu: 0.0.40
codegen_flags: <defaults>
</compile_context>

<pallas_src>
import functools

import jax
import jax.numpy as jnp
from jax.experimental import pallas as pl
from jax.experimental.pallas import tpu as pltpu

_LANE = 128      # f32 lane tiling (last dim)
_SUBLANE = 8     # f32 sublane tiling (second-to-last dim)
_MIB = 1024 * 1024


def _round_up(x, m):
    return (x + m - 1) // m * m


def _pad2d(x, rows, cols):
    r, c = x.shape
    if r == rows and c == cols:
        return x
    return jnp.pad(x, ((0, rows - r), (0, cols - c)))


def _device_kind():
    try:
        return jax.devices()[0].device_kind.lower()
    except Exception:
        return ""


def _vmem_cap_bytes():
    # v7x: 64 MiB VMEM per TensorCore -> never request all of it (Mosaic needs
    # internal scratch).  v5e/v6e: 128 MiB physical -> allow much larger tiles.
    return 52 * _MIB if "v7" in _device_kind() else 100 * _MIB


def _leaky_relu(x):
    # The module explicitly uses F.leaky_relu(cat, negative_slope=0.1)
    # (NOT PyTorch's 0.01 default).
    return jnp.where(x >= 0, x, 0.1 * x)


# --------------------------------------------------------------------------- #
# Kernels
# --------------------------------------------------------------------------- #

def _eat_kernel(*refs, residual):
    (ev_ref, ag_ref, th_ref), rest = refs[:3], refs[3:]
    if residual:
        res_ref, rest = rest[0], rest[1:]
    else:
        res_ref = None
    (we_ref, wa_ref, wt_ref, be_ref, ba_ref, bt_ref,
     whe_ref, wha_ref, wht_ref, bh_ref,
     out_ref, he_s, ha_s, ht_s) = rest

    # First-layer projections + leaky_relu are invariant along the d_out column
    # axis: compute once per row block (j == 0), cache in VMEM scratch so the
    # remaining column tiles reuse them (no recompute when d_out is tiled).
    @pl.when(pl.program_id(1) == 0)
    def _():
        def proj(x_ref, w_ref, b_ref, h_ref):
            h = jnp.dot(x_ref[...], w_ref[...],
                        preferred_element_type=jnp.float32)
            h_ref[...] = _leaky_relu(h + b_ref[...]).astype(h_ref.dtype)
        proj(ev_ref, we_ref, be_ref, he_s)
        proj(ag_ref, wa_ref, ba_ref, ha_s)
        proj(th_ref, wt_ref, bt_ref, ht_s)

    # cat([he, ha, ht]) @ W_h == he @ W_h[:d] + ha @ W_h[d:2d] + ht @ W_h[2d:3d]
    # Sequential accumulation into one f32 accumulator keeps vreg pressure low.
    acc = jnp.dot(he_s[...], whe_ref[...], preferred_element_type=jnp.float32)
    acc = acc + jnp.dot(ha_s[...], wha_ref[...], preferred_element_type=jnp.float32)
    acc = acc + jnp.dot(ht_s[...], wht_ref[...], preferred_element_type=jnp.float32)
    acc = acc + bh_ref[...]
    if residual:
        acc = acc + res_ref[...].astype(jnp.float32)   # full-precision residual
    out_ref[...] = acc.astype(out_ref.dtype)


def _sum_kernel(ev_ref, ag_ref, th_ref, out_ref):
    out_ref[...] = ev_ref[...] + ag_ref[...] + th_ref[...]


# --------------------------------------------------------------------------- #
# Wrappers
# --------------------------------------------------------------------------- #

def _sum_mode(event, agent, theme, cap):
    """event + agent + theme on a lane-dense slab (unmasked 512-wide stores)."""
    n_rows, d_in = event.shape
    out_dtype = event.dtype
    lane = 4 * _LANE
    total = n_rows * d_in
    total_p = _round_up(total, lane * _SUBLANE)

    def slab(x):
        return jnp.pad(x.reshape(-1), (0, total_p - total)).reshape(-1, lane)

    ev, ag, th = slab(event), slab(agent), slab(theme)
    n_slab_rows = total_p // lane

    itemsize = jnp.dtype(out_dtype).itemsize
    # ~2 MiB per-operand tiles (HBM-roofline sweet spot), >=2 steps for v7x's 2 TCs.
    tile = max(_SUBLANE, min(n_slab_rows, (2 * _MIB) // (lane * itemsize)))
    tile = _round_up(tile, _SUBLANE)
    while pl.cdiv(n_slab_rows, tile) < 2 and tile > _SUBLANE:
        tile = max(_SUBLANE, _round_up(tile // 2, _SUBLANE))

    need = int(4 * 2 * tile * lane * itemsize * 1.3) + 2 * _MIB
    vmem_limit = min(cap, max(32 * _MIB, need))

    out = pl.pallas_call(
        _sum_kernel,
        out_shape=jax.ShapeDtypeStruct((n_slab_rows, lane), out_dtype),
        grid=(pl.cdiv(n_slab_rows, tile),),
        in_specs=[pl.BlockSpec((tile, lane), lambda i: (i, 0))] * 3,
        out_specs=pl.BlockSpec((tile, lane), lambda i: (i, 0)),
        compiler_params=pltpu.CompilerParams(
            dimension_semantics=("parallel",),
            vmem_limit_bytes=vmem_limit),
    )(ev, ag, th)
    return out.reshape(-1)[:total].reshape(n_rows, d_in)


def eat_layer(event, agent, theme, params, mode="residual",
              row_tile=None, dout_tile=None, compute_dtype=None,
              single_buffer_weights=None):
    """Pallas implementation of EatLayer.forward.

    event/agent/theme: [N, d_in].
    params: w_e/w_a/w_t [d_in, d_hid], b_e/b_a/b_t [1, d_hid],
            w_h [3*d_hid, d_out], b_h [1, d_out].
    compute_dtype: matmul operand dtype (default bf16; f32 accumulation always).
    """
    assert mode in ("nonlinear", "sum", "residual")
    n_rows, d_in = event.shape
    out_dtype = event.dtype
    cap = _vmem_cap_bytes()

    if mode == "sum":
        return _sum_mode(event, agent, theme, cap)

    d_hid = params["w_e"].shape[1]
    d_out = params["w_h"].shape[1]
    residual = mode == "residual"
    if residual:
        assert d_in == d_out, "residual mode requires d_in == d_out"

    cdt = compute_dtype if compute_dtype is not None else jnp.bfloat16
    cdt_size = jnp.dtype(cdt).itemsize
    out_size = jnp.dtype(out_dtype).itemsize

    # Lane-dense padding of feature dims (zeros -> math unchanged, sliced off at end).
    d_in_p = _round_up(d_in, _LANE)
    d_hid_p = _round_up(d_hid, _LANE)
    d_out_p = _round_up(d_out, _LANE)
    n_8 = _round_up(n_rows, _SUBLANE)          # rows padded ONLY to the sublane multiple

    # ----- row tiling -------------------------------------------------------
    if row_tile is None:
        row_tile = 256
    row_tile = max(_SUBLANE, _round_up(min(row_tile, n_8), _SUBLANE))
    # >= 2 row blocks so ("parallel", ...) can shard across v7x's 2 TCs (64-row floor).
    while pl.cdiv(n_8, row_tile) < 2 and row_tile > 64:
        row_tile = max(64, _round_up(row_tile // 2, _SUBLANE))
    # Rebalance block sizes so the last block is not mostly out-of-bounds
    # (no more up-to-row_tile-1 rows of wasted DMA / MXU work for ragged sizes).
    n_row_blocks = pl.cdiv(n_8, row_tile)
    row_tile = _round_up(pl.cdiv(n_8, n_row_blocks), _SUBLANE)
    n_row_blocks = pl.cdiv(n_8, row_tile)

    # ----- column (d_out) tiling + VMEM budgeting ---------------------------
    def vmem_need(rt, ct, single_w):
        w1_buf = 1 if single_w else 2
        wh_buf = 1 if (single_w and ct == d_out_p) else 2
        need = 3 * 2 * rt * d_in_p * cdt_size               # ev/ag/th, double-buffered
        need += 2 * rt * ct * out_size                      # output tile
        if residual:
            need += 2 * rt * ct * out_size                  # residual stream
        need += 3 * w1_buf * d_in_p * d_hid_p * cdt_size    # W_e/W_a/W_t
        need += 3 * w1_buf * _SUBLANE * d_hid_p * 4         # f32 biases (sublane-padded)
        need += 3 * wh_buf * d_hid_p * ct * cdt_size        # W_h thirds
        need += wh_buf * _SUBLANE * ct * 4                  # b_h
        need += 3 * rt * d_hid_p * cdt_size                 # cached activations (scratch)
        return int(need * 1.25) + 2 * _MIB                  # ~25% headroom

    has_buffered = hasattr(pl, "Buffered")
    if single_buffer_weights is None:
        want_single, allow_fallback = has_buffered, True
    else:
        want_single, allow_fallback = bool(single_buffer_weights) and has_buffered, False

    if dout_tile is None:
        dout_tile = d_out_p
        while vmem_need(row_tile, dout_tile, want_single) > cap and dout_tile > 2 * _LANE:
            dout_tile = max(2 * _LANE, _round_up(dout_tile // 2, _LANE))
        while vmem_need(row_tile, dout_tile, want_single) > cap and row_tile > 64:
            row_tile = max(64, _round_up(row_tile // 2, _SUBLANE))
            n_row_blocks = pl.cdiv(n_8, row_tile)
        # TODO(synk): if the three first-layer weights alone exceed the cap
        # (very large d_in*d_hid), also tile the d_hid contraction axis.
    else:
        dout_tile = _round_up(min(dout_tile, d_out_p), _LANE)
    n_col_blocks = pl.cdiv(d_out_p, dout_tile)

    # ----- operands (bf16 matmul inputs, f32 biases, full-precision residual) -----
    prep_x = lambda x: _pad2d(x, n_8, d_in_p).astype(cdt)
    prep_w = lambda w, r, c: _pad2d(w, r, c).astype(cdt)
    prep_b = lambda b, c: _pad2d(b.reshape(1, -1), 1, c).astype(jnp.float32)

    ev, ag, th = prep_x(event), prep_x(agent), prep_x(theme)
    w_e = prep_w(params["w_e"], d_in_p, d_hid_p)
    w_a = prep_w(params["w_a"], d_in_p, d_hid_p)
    w_t = prep_w(params["w_t"], d_in_p, d_hid_p)
    b_e = prep_b(params["b_e"], d_hid_p)
    b_a = prep_b(params["b_a"], d_hid_p)
    b_t = prep_b(params["b_t"], d_hid_p)
    w_h = params["w_h"]                       # pre-split: no in-kernel weight slicing
    w_h_e = prep_w(w_h[0 * d_hid:1 * d_hid], d_hid_p, d_out_p)
    w_h_a = prep_w(w_h[1 * d_hid:2 * d_hid], d_hid_p, d_out_p)
    w_h_t = prep_w(w_h[2 * d_hid:3 * d_hid], d_hid_p, d_out_p)
    b_h = prep_b(params["b_h"], d_out_p)

    operands = [ev, ag, th]
    if residual:
        operands.append(_pad2d(event + agent + theme, n_8, d_out_p))
    operands += [w_e, w_a, w_t, b_e, b_a, b_t, w_h_e, w_h_a, w_h_t, b_h]

    row_spec = pl.BlockSpec((row_tile, d_in_p), lambda i, j: (i, 0))
    out_spec = pl.BlockSpec((row_tile, dout_tile), lambda i, j: (i, j))

    def build_specs(single_w):
        def const(shape, index_map):
            if single_w:
                # Grid-invariant operand: fetched once, single-buffered.
                return pl.BlockSpec(shape, index_map, pipeline_mode=pl.Buffered(1))
            return pl.BlockSpec(shape, index_map)
        first_w = const((d_in_p, d_hid_p), lambda i, j: (0, 0))
        first_b = const((1, d_hid_p), lambda i, j: (0, 0))
        if n_col_blocks == 1:
            wh = const((d_hid_p, dout_tile), lambda i, j: (0, j))
            bh = const((1, dout_tile), lambda i, j: (0, j))
        else:  # W_h blocks change with j -> keep them pipelined (double-buffered)
            wh = pl.BlockSpec((d_hid_p, dout_tile), lambda i, j: (0, j))
            bh = pl.BlockSpec((1, dout_tile), lambda i, j: (0, j))
        specs = [row_spec, row_spec, row_spec]
        if residual:
            specs.append(pl.BlockSpec((row_tile, dout_tile), lambda i, j: (i, j)))
        specs += [first_w, first_w, first_w, first_b, first_b, first_b,
                  wh, wh, wh, bh]
        return specs

    flops = 2 * n_8 * (3 * d_in_p * d_hid_p + 3 * d_hid_p * d_out_p)
    bytes_accessed = (3 * n_8 * d_in_p * cdt_size
                      + 3 * d_in_p * d_hid_p * cdt_size
                      + 3 * d_hid_p * d_out_p * cdt_size
                      + (2 if residual else 1) * n_8 * d_out_p * out_size)
    cost = pl.CostEstimate(flops=flops, transcendentals=0,
                           bytes_accessed=bytes_accessed)

    kernel = functools.partial(_eat_kernel, residual=residual)
    scratch = [pltpu.VMEM((row_tile, d_hid_p), cdt)] * 3

    def call(single_w):
        vmem_limit = min(cap, max(32 * _MIB, vmem_need(row_tile, dout_tile, single_w)))
        grid_spec = pltpu.PrefetchScalarGridSpec(
            num_scalar_prefetch=0,
            grid=(n_row_blocks, n_col_blocks),
            in_specs=build_specs(single_w),
            out_specs=out_spec,
            scratch_shapes=scratch)
        return pl.pallas_call(
            kernel,
            out_shape=jax.ShapeDtypeStruct((n_8, d_out_p), out_dtype),
            grid_spec=grid_spec,
            compiler_params=pltpu.CompilerParams(
                # Rows shard across v7x's 2 TensorCores; the d_out axis carries
                # the cached first-layer activations in scratch -> "arbitrary".
                dimension_semantics=("parallel", "arbitrary"),
                vmem_limit_bytes=vmem_limit),
            cost_estimate=cost,
        )(*operands)

    if want_single and allow_fallback:
        try:
            out = call(True)
        except Exception:
            # Eager-path fallback only (Mosaic compiles at call time here): if
            # Buffered(1) does not lower in this build, rebuild with default
            # double-buffered weights and a correspondingly larger VMEM budget.
            # Under jax.jit, pass single_buffer_weights explicitly instead.
            out = call(False)
    else:
        out = call(want_single)
    return out[:n_rows, :d_out]


# --------------------------------------------------------------------------- #
# Reference + params
# --------------------------------------------------------------------------- #

def eat_layer_ref(event, agent, theme, params, mode="residual"):
    """Pure-JAX reference mirroring the PyTorch forward exactly."""
    if mode == "sum":
        return event + agent + theme
    he = event @ params["w_e"] + params["b_e"]
    ha = agent @ params["w_a"] + params["b_a"]
    ht = theme @ params["w_t"] + params["b_t"]
    cat = jnp.concatenate([he, ha, ht], axis=-1)
    cat = jnp.where(cat >= 0, cat, 0.1 * cat)
    out = cat @ params["w_h"] + params["b_h"]
    if mode == "residual":
        out = out + event + agent + theme
    return out


def init_params(key, d_in, d_hid, d_out):
    ks = jax.random.split(key, 8)
    s_in = 1.0 / jnp.sqrt(d_in)
    s_h = 1.0 / jnp.sqrt(3 * d_hid)
    return {
        "w_e": jax.random.uniform(ks[0], (d_in, d_hid), jnp.float32, -s_in, s_in),
        "b_e": jax.random.uniform(ks[1], (1, d_hid), jnp.float32, -s_in, s_in),
        "w_a": jax.random.uniform(ks[2], (d_in, d_hid), jnp.float32, -s_in, s_in),
        "b_a": jax.random.uniform(ks[3], (1, d_hid), jnp.float32, -s_in, s_in),
        "w_t": jax.random.uniform(ks[4], (d_in, d_hid), jnp.float32, -s_in, s_in),
        "b_t": jax.random.uniform(ks[5], (1, d_hid), jnp.float32, -s_in, s_in),
        "w_h": jax.random.uniform(ks[6], (3 * d_hid, d_out), jnp.float32, -s_h, s_h),
        "b_h": jax.random.uniform(ks[7], (1, d_out), jnp.float32, -s_h, s_h),
    }


if __name__ == "__main__":
    errs = []

    def run_check(tag, out, ref, atol, rtol):
        out = jax.block_until_ready(out)
        if out.shape != ref.shape:
            errs.append(f"{tag}: shape {out.shape} vs {ref.shape}")
        elif not jnp.allclose(out.astype(jnp.float32), ref, atol=atol, rtol=rtol):
            err = float(jnp.max(jnp.abs(out.astype(jnp.float32) - ref)))
            errs.append(f"{tag}: MISMATCH max_err={err}")

    # --- small shapes from the module: batch=2, seq=8 -> 16 rows, dims 32 ---
    batch, seq, d_in, d_hid, d_out = 2, 8, 32, 32, 32
    n_rows = batch * seq
    key = jax.random.PRNGKey(0)
    k_ev, k_ag, k_th, k_p, k2 = jax.random.split(key, 5)
    event = jax.random.normal(k_ev, (n_rows, d_in), jnp.float32)
    agent = jax.random.normal(k_ag, (n_rows, d_in), jnp.float32)
    theme = jax.random.normal(k_th, (n_rows, d_in), jnp.float32)
    params = init_params(k_p, d_in, d_hid, d_out)

    for mode in ("residual", "nonlinear", "sum"):
        out = eat_layer(event, agent, theme, params, mode=mode,
                        compute_dtype=jnp.float32)
        run_check(f"f32/{mode}", out,
                  eat_layer_ref(event, agent, theme, params, mode=mode), 1e-4, 1e-4)

    # Default bf16 MXU path (f32 accumulation / f32 residual) -> loose tolerance.
    run_check("bf16/residual",
              eat_layer(event, agent, theme, params, mode="residual"),
              eat_layer_ref(event, agent, theme, params, mode="residual"), 0.15, 0.05)

    # --- ragged rows + non-128-aligned feature dims (padding / tail handling) ---
    n2, di2, dh2, do2 = 300, 96, 80, 96
    ke, ka, kt, kp, k3 = jax.random.split(k2, 5)
    ev2 = jax.random.normal(ke, (n2, di2), jnp.float32)
    ag2 = jax.random.normal(ka, (n2, di2), jnp.float32)
    th2 = jax.random.normal(kt, (n2, di2), jnp.float32)
    p2 = init_params(kp, di2, dh2, do2)
    for mode in ("residual", "nonlinear", "sum"):
        out = eat_layer(ev2, ag2, th2, p2, mode=mode, compute_dtype=jnp.float32)
        run_check(f"ragged-f32/{mode}", out,
                  eat_layer_ref(ev2, ag2, th2, p2, mode=mode), 1e-3, 1e-3)
    run_check("ragged-bf16/residual",
              eat_layer(ev2, ag2, th2, p2, mode="residual"),
              eat_layer_ref(ev2, ag2, th2, p2, mode="residual"), 0.2, 0.05)

    # --- multi-row-block + forced d_out column tiling (exercise scratch caching) ---
    n3, di3, dh3, do3 = 200, 256, 160, 256
    ke3, ka3, kt3, kp3 = jax.random.split(k3, 4)
    ev3 = jax.random.normal(ke3, (n3, di3), jnp.float32)
    ag3 = jax.random.normal(ka3, (n3, di3), jnp.float32)
    th3 = jax.random.normal(kt3, (n3, di3), jnp.float32)
    p3 = init_params(kp3, di3, dh3, do3)
    for mode in ("residual", "nonlinear"):
        out = eat_layer(ev3, ag3, th3, p3, mode=mode,
                        compute_dtype=jnp.float32, dout_tile=128)
        run_check(f"coltile-f32/{mode}", out,
                  eat_layer_ref(ev3, ag3, th3, p3, mode=mode), 1e-3, 1e-3)

    if errs:
        for e in errs:
            print(e)
    else:
        print("KERNEL_OK")
</pallas_src>

<mosaic_0001>
module attributes {stable_mosaic.version = 11 : i64} {
  func.func @_eat_kernel(%arg0: i32, %arg1: i32, %arg2: memref<16x128xf32, #tpu.memory_space<vmem>>, %arg3: memref<16x128xf32, #tpu.memory_space<vmem>>, %arg4: memref<16x128xf32, #tpu.memory_space<vmem>>, %arg5: memref<16x128xf32, #tpu.memory_space<vmem>>, %arg6: memref<128x128xf32, #tpu.memory_space<vmem>>, %arg7: memref<128x128xf32, #tpu.memory_space<vmem>>, %arg8: memref<128x128xf32, #tpu.memory_space<vmem>>, %arg9: memref<1x128xf32, #tpu.memory_space<vmem>>, %arg10: memref<1x128xf32, #tpu.memory_space<vmem>>, %arg11: memref<1x128xf32, #tpu.memory_space<vmem>>, %arg12: memref<128x128xf32, #tpu.memory_space<vmem>>, %arg13: memref<128x128xf32, #tpu.memory_space<vmem>>, %arg14: memref<128x128xf32, #tpu.memory_space<vmem>>, %arg15: memref<1x128xf32, #tpu.memory_space<vmem>>, %arg16: memref<16x128xf32, #tpu.memory_space<vmem>>, %arg17: memref<16x128xf32, #tpu.memory_space<vmem>>, %arg18: memref<16x128xf32, #tpu.memory_space<vmem>>, %arg19: memref<16x128xf32, #tpu.memory_space<vmem>>) attributes {dimension_semantics = [#tpu.dimension_semantics<parallel>, #tpu.dimension_semantics<arbitrary>], iteration_bounds = array<i64: 1, 1>, scalar_prefetch = 0 : i64, scratch_operands = 3 : i64, tpu.core_type = #tpu.core_type<tc>, window_params = [{transform_indices = @transform_0, window_bounds = array<i64: 16, 128>}, {transform_indices = @transform_1, window_bounds = array<i64: 16, 128>}, {transform_indices = @transform_2, window_bounds = array<i64: 16, 128>}, {transform_indices = @transform_3, window_bounds = array<i64: 16, 128>}, {pipeline_mode = #tpu.pipeline_mode<synchronous>, transform_indices = @transform_4, window_bounds = array<i64: 128, 128>}, {pipeline_mode = #tpu.pipeline_mode<synchronous>, transform_indices = @transform_5, window_bounds = array<i64: 128, 128>}, {pipeline_mode = #tpu.pipeline_mode<synchronous>, transform_indices = @transform_6, window_bounds = array<i64: 128, 128>}, {pipeline_mode = #tpu.pipeline_mode<synchronous>, transform_indices = @transform_7, window_bounds = array<i64: 1, 128>}, {pipeline_mode = #tpu.pipeline_mode<synchronous>, transform_indices = @transform_8, window_bounds = array<i64: 1, 128>}, {pipeline_mode = #tpu.pipeline_mode<synchronous>, transform_indices = @transform_9, window_bounds = array<i64: 1, 128>}, {pipeline_mode = #tpu.pipeline_mode<synchronous>, transform_indices = @transform_10, window_bounds = array<i64: 128, 128>}, {pipeline_mode = #tpu.pipeline_mode<synchronous>, transform_indices = @transform_11, window_bounds = array<i64: 128, 128>}, {pipeline_mode = #tpu.pipeline_mode<synchronous>, transform_indices = @transform_12, window_bounds = array<i64: 128, 128>}, {pipeline_mode = #tpu.pipeline_mode<synchronous>, transform_indices = @transform_13, window_bounds = array<i64: 1, 128>}, {transform_indices = @transform_14, window_bounds = array<i64: 16, 128>}]} {
    %c0_i32 = arith.constant 0 : i32
    %0 = arith.cmpi eq, %arg1, %c0_i32 : i32
    %1 = arith.extui %0 : i1 to i32
    %c0_i32_0 = arith.constant 0 : i32
    %2 = arith.cmpi ne, %1, %c0_i32_0 : i32
    scf.if %2 {
      %c0_20 = arith.constant 0 : index
      %c0_21 = arith.constant 0 : index
      %20 = vector.load %arg2[%c0_20, %c0_21] : memref<16x128xf32, #tpu.memory_space<vmem>>, vector<16x128xf32>
      %c0_22 = arith.constant 0 : index
      %c0_23 = arith.constant 0 : index
      %21 = vector.load %arg6[%c0_22, %c0_23] : memref<128x128xf32, #tpu.memory_space<vmem>>, vector<128x128xf32>
      %cst_24 = arith.constant dense<0.000000e+00> : vector<16x128xf32>
      %22 = tpu.matmul %20, %21, %cst_24 {dimension_numbers = #tpu.dot_dimension_numbers<[1], [0], [0], [1], [0, 0, 1, 1], [], []>} : vector<16x128xf32>, vector<128x128xf32>, vector<16x128xf32> -> vector<16x128xf32>
      %c0_25 = arith.constant 0 : index
      %c0_26 = arith.constant 0 : index
      %23 = vector.load %arg9[%c0_25, %c0_26] : memref<1x128xf32, #tpu.memory_space<vmem>>, vector<1x128xf32>
      %24 = vector.broadcast %23 : vector<1x128xf32> to vector<16x128xf32>
      %25 = arith.addf %22, %24 : vector<16x128xf32>
      %cst_27 = arith.constant 0.000000e+00 : f32
      %26 = vector.broadcast %cst_27 : f32 to vector<16x128xf32>
      %27 = arith.cmpf oge, %25, %26 : vector<16x128xf32>
      %cst_28 = arith.constant 1.000000e-01 : f32
      %28 = vector.broadcast %cst_28 : f32 to vector<16x128xf32>
      %29 = arith.mulf %28, %25 : vector<16x128xf32>
      %30 = arith.select %27, %25, %29 : vector<16x128xi1>, vector<16x128xf32>
      %c0_29 = arith.constant 0 : index
      %c0_30 = arith.constant 0 : index
      %31 = vector.load %arg17[%c0_29, %c0_30] : memref<16x128xf32, #tpu.memory_space<vmem>>, vector<16x128xf32>
      tpu.vector_store %arg17[%c0_29, %c0_30], %30 {strides = array<i32>} : memref<16x128xf32, #tpu.memory_space<vmem>>, vector<16x128xf32>,
      %c0_31 = arith.constant 0 : index
      %c0_32 = arith.constant 0 : index
      %32 = vector.load %arg3[%c0_31, %c0_32] : memref<16x128xf32, #tpu.memory_space<vmem>>, vector<16x128xf32>
      %c0_33 = arith.constant 0 : index
      %c0_34 = arith.constant 0 : index
      %33 = vector.load %arg7[%c0_33, %c0_34] : memref<128x128xf32, #tpu.memory_space<vmem>>, vector<128x128xf32>
      %cst_35 = arith.constant dense<0.000000e+00> : vector<16x128xf32>
      %34 = tpu.matmul %32, %33, %cst_35 {dimension_numbers = #tpu.dot_dimension_numbers<[1], [0], [0], [1], [0, 0, 1, 1], [], []>} : vector<16x128xf32>, vector<128x128xf32>, vector<16x128xf32> -> vector<16x128xf32>
      %c0_36 = arith.constant 0 : index
      %c0_37 = arith.constant 0 : index
      %35 = vector.load %arg10[%c0_36, %c0_37] : memref<1x128xf32, #tpu.memory_space<vmem>>, vector<1x128xf32>
      %36 = vector.broadcast %35 : vector<1x128xf32> to vector<16x128xf32>
      %37 = arith.addf %34, %36 : vector<16x128xf32>
      %cst_38 = arith.constant 0.000000e+00 : f32
      %38 = vector.broadcast %cst_38 : f32 to vector<16x128xf32>
      %39 = arith.cmpf oge, %37, %38 : vector<16x128xf32>
      %cst_39 = arith.constant 1.000000e-01 : f32
      %40 = vector.broadcast %cst_39 : f32 to vector<16x128xf32>
      %41 = arith.mulf %40, %37 : vector<16x128xf32>
      %42 = arith.select %39, %37, %41 : vector<16x128xi1>, vector<16x128xf32>
      %c0_40 = arith.constant 0 : index
      %c0_41 = arith.constant 0 : index
      %43 = vector.load %arg18[%c0_40, %c0_41] : memref<16x128xf32, #tpu.memory_space<vmem>>, vector<16x128xf32>
      tpu.vector_store %arg18[%c0_40, %c0_41], %42 {strides = array<i32>} : memref<16x128xf32, #tpu.memory_space<vmem>>, vector<16x128xf32>,
      %c0_42 = arith.constant 0 : index
      %c0_43 = arith.constant 0 : index
      %44 = vector.load %arg4[%c0_42, %c0_43] : memref<16x128xf32, #tpu.memory_space<vmem>>, vector<16x128xf32>
      %c0_44 = arith.constant 0 : index
      %c0_45 = arith.constant 0 : index
      %45 = vector.load %arg8[%c0_44, %c0_45] : memref<128x128xf32, #tpu.memory_space<vmem>>, vector<128x128xf32>
      %cst_46 = arith.constant dense<0.000000e+00> : vector<16x128xf32>
      %46 = tpu.matmul %44, %45, %cst_46 {dimension_numbers = #tpu.dot_dimension_numbers<[1], [0], [0], [1], [0, 0, 1, 1], [], []>} : vector<16x128xf32>, vector<128x128xf32>, vector<16x128xf32> -> vector<16x128xf32>
      %c0_47 = arith.constant 0 : index
      %c0_48 = arith.constant 0 : index
      %47 = vector.load %arg11[%c0_47, %c0_48] : memref<1x128xf32, #tpu.memory_space<vmem>>, vector<1x128xf32>
      %48 = vector.broadcast %47 : vector<1x128xf32> to vector<16x128xf32>
      %49 = arith.addf %46, %48 : vector<16x128xf32>
      %cst_49 = arith.constant 0.000000e+00 : f32
      %50 = vector.broadcast %cst_49 : f32 to vector<16x128xf32>
      %51 = arith.cmpf oge, %49, %50 : vector<16x128xf32>
      %cst_50 = arith.constant 1.000000e-01 : f32
      %52 = vector.broadcast %cst_50 : f32 to vector<16x128xf32>
      %53 = arith.mulf %52, %49 : vector<16x128xf32>
      %54 = arith.select %51, %49, %53 : vector<16x128xi1>, vector<16x128xf32>
      %c0_51 = arith.constant 0 : index
      %c0_52 = arith.constant 0 : index
      %55 = vector.load %arg19[%c0_51, %c0_52] : memref<16x128xf32, #tpu.memory_space<vmem>>, vector<16x128xf32>
      tpu.vector_store %arg19[%c0_51, %c0_52], %54 {strides = array<i32>} : memref<16x128xf32, #tpu.memory_space<vmem>>, vector<16x128xf32>,
    } else {
    }
    %c0 = arith.constant 0 : index
    %c0_1 = arith.constant 0 : index
    %3 = vector.load %arg17[%c0, %c0_1] : memref<16x128xf32, #tpu.memory_space<vmem>>, vector<16x128xf32>
    %c0_2 = arith.constant 0 : index
    %c0_3 = arith.constant 0 : index
    %4 = vector.load %arg12[%c0_2, %c0_3] : memref<128x128xf32, #tpu.memory_space<vmem>>, vector<128x128xf32>
    %cst = arith.constant dense<0.000000e+00> : vector<16x128xf32>
    %5 = tpu.matmul %3, %4, %cst {dimension_numbers = #tpu.dot_dimension_numbers<[1], [0], [0], [1], [0, 0, 1, 1], [], []>} : vector<16x128xf32>, vector<128x128xf32>, vector<16x128xf32> -> vector<16x128xf32>
    %c0_4 = arith.constant 0 : index
    %c0_5 = arith.constant 0 : index
    %6 = vector.load %arg18[%c0_4, %c0_5] : memref<16x128xf32, #tpu.memory_space<vmem>>, vector<16x128xf32>
    %c0_6 = arith.constant 0 : index
    %c0_7 = arith.constant 0 : index
    %7 = vector.load %arg13[%c0_6, %c0_7] : memref<128x128xf32, #tpu.memory_space<vmem>>, vector<128x128xf32>
    %cst_8 = arith.constant dense<0.000000e+00> : vector<16x128xf32>
    %8 = tpu.matmul %6, %7, %cst_8 {dimension_numbers = #tpu.dot_dimension_numbers<[1], [0], [0], [1], [0, 0, 1, 1], [], []>} : vector<16x128xf32>, vector<128x128xf32>, vector<16x128xf32> -> vector<16x128xf32>
    %9 = arith.addf %5, %8 : vector<16x128xf32>
    %c0_9 = arith.constant 0 : index
    %c0_10 = arith.constant 0 : index
    %10 = vector.load %arg19[%c0_9, %c0_10] : memref<16x128xf32, #tpu.memory_space<vmem>>, vector<16x128xf32>
    %c0_11 = arith.constant 0 : index
    %c0_12 = arith.constant 0 : index
    %11 = vector.load %arg14[%c0_11, %c0_12] : memref<128x128xf32, #tpu.memory_space<vmem>>, vector<128x128xf32>
    %cst_13 = arith.constant dense<0.000000e+00> : vector<16x128xf32>
    %12 = tpu.matmul %10, %11, %cst_13 {dimension_numbers = #tpu.dot_dimension_numbers<[1], [0], [0], [1], [0, 0, 1, 1], [], []>} : vector<16x128xf32>, vector<128x128xf32>, vector<16x128xf32> -> vector<16x128xf32>
    %13 = arith.addf %9, %12 : vector<16x128xf32>
    %c0_14 = arith.constant 0 : index
    %c0_15 = arith.constant 0 : index
    %14 = vector.load %arg15[%c0_14, %c0_15] : memref<1x128xf32, #tpu.memory_space<vmem>>, vector<1x128xf32>
    %15 = vector.broadcast %14 : vector<1x128xf32> to vector<16x128xf32>
    %16 = arith.addf %13, %15 : vector<16x128xf32>
    %c0_16 = arith.constant 0 : index
    %c0_17 = arith.constant 0 : index
    %17 = vector.load %arg5[%c0_16, %c0_17] : memref<16x128xf32, #tpu.memory_space<vmem>>, vector<16x128xf32>
    %18 = arith.addf %16, %17 : vector<16x128xf32>
    %c0_18 = arith.constant 0 : index
    %c0_19 = arith.constant 0 : index
    %19 = vector.load %arg16[%c0_18, %c0_19] : memref<16x128xf32, #tpu.memory_space<vmem>>, vector<16x128xf32>
    tpu.vector_store %arg16[%c0_18, %c0_19], %18 {strides = array<i32>} : memref<16x128xf32, #tpu.memory_space<vmem>>, vector<16x128xf32>,
    return
  }
  func.func @transform_0(%arg0: i32, %arg1: i32) -> (i32, i32) {
    %c0_i32 = arith.constant 0 : i32
    %c0_i32_0 = arith.constant 0 : i32
    return %arg0, %c0_i32 : i32, i32
  }
  func.func @transform_1(%arg0: i32, %arg1: i32) -> (i32, i32) {
    %c0_i32 = arith.constant 0 : i32
    %c0_i32_0 = arith.constant 0 : i32
    return %arg0, %c0_i32 : i32, i32
  }
  func.func @transform_2(%arg0: i32, %arg1: i32) -> (i32, i32) {
    %c0_i32 = arith.constant 0 : i32
    %c0_i32_0 = arith.constant 0 : i32
    return %arg0, %c0_i32 : i32, i32
  }
  func.func @transform_3(%arg0: i32, %arg1: i32) -> (i32, i32) {
    %c0_i32 = arith.constant 0 : i32
    return %arg0, %arg1 : i32, i32
  }
  func.func @transform_4(%arg0: i32, %arg1: i32) -> (i32, i32) {
    %c0_i32 = arith.constant 0 : i32
    %c0_i32_0 = arith.constant 0 : i32
    %c0_i32_1 = arith.constant 0 : i32
    return %c0_i32, %c0_i32_0 : i32, i32
  }
  func.func @transform_5(%arg0: i32, %arg1: i32) -> (i32, i32) {
    %c0_i32 = arith.constant 0 : i32
    %c0_i32_0 = arith.constant 0 : i32
    %c0_i32_1 = arith.constant 0 : i32
    return %c0_i32, %c0_i32_0 : i32, i32
  }
  func.func @transform_6(%arg0: i32, %arg1: i32) -> (i32, i32) {
    %c0_i32 = arith.constant 0 : i32
    %c0_i32_0 = arith.constant 0 : i32
    %c0_i32_1 = arith.constant 0 : i32
    return %c0_i32, %c0_i32_0 : i32, i32
  }
  func.func @transform_7(%arg0: i32, %arg1: i32) -> (i32, i32) {
    %c0_i32 = arith.constant 0 : i32
    %c0_i32_0 = arith.constant 0 : i32
    %c0_i32_1 = arith.constant 0 : i32
    return %c0_i32, %c0_i32_0 : i32, i32
  }
  func.func @transform_8(%arg0: i32, %arg1: i32) -> (i32, i32) {
    %c0_i32 = arith.constant 0 : i32
    %c0_i32_0 = arith.constant 0 : i32
    %c0_i32_1 = arith.constant 0 : i32
    return %c0_i32, %c0_i32_0 : i32, i32
  }
  func.func @transform_9(%arg0: i32, %arg1: i32) -> (i32, i32) {
    %c0_i32 = arith.constant 0 : i32
    %c0_i32_0 = arith.constant 0 : i32
    %c0_i32_1 = arith.constant 0 : i32
    return %c0_i32, %c0_i32_0 : i32, i32
  }
  func.func @transform_10(%arg0: i32, %arg1: i32) -> (i32, i32) {
    %c0_i32 = arith.constant 0 : i32
    %c0_i32_0 = arith.constant 0 : i32
    return %c0_i32, %arg1 : i32, i32
  }
  func.func @transform_11(%arg0: i32, %arg1: i32) -> (i32, i32) {
    %c0_i32 = arith.constant 0 : i32
    %c0_i32_0 = arith.constant 0 : i32
    return %c0_i32, %arg1 : i32, i32
  }
  func.func @transform_12(%arg0: i32, %arg1: i32) -> (i32, i32) {
    %c0_i32 = arith.constant 0 : i32
    %c0_i32_0 = arith.constant 0 : i32
    return %c0_i32, %arg1 : i32, i32
  }
  func.func @transform_13(%arg0: i32, %arg1: i32) -> (i32, i32) {
    %c0_i32 = arith.constant 0 : i32
    %c0_i32_0 = arith.constant 0 : i32
    return %c0_i32, %arg1 : i32, i32
  }
  func.func @transform_14(%arg0: i32, %arg1: i32) -> (i32, i32) {
    %c0_i32 = arith.constant 0 : i32
    return %arg0, %arg1 : i32, i32
  }
}

module attributes {stable_mosaic.version = 11 : i64} {
  func.func @_eat_kernel(%arg0: i32, %arg1: i32, %arg2: memref<16x128xf32, #tpu.memory_space<vmem>>, %arg3: memref<16x128xf32, #tpu.memory_space<vmem>>, %arg4: memref<16x128xf32, #tpu.memory_space<vmem>>, %arg5: memref<16x128xf32, #tpu.memory_space<vmem>>, %arg6: memref<128x128xf32, #tpu.memory_space<vmem>>, %arg7: memref<128x128xf32, #tpu.memory_space<vmem>>, %arg8: memref<128x128xf32, #tpu.memory_space<vmem>>, %arg9: memref<1x128xf32, #tpu.memory_space<vmem>>, %arg10: memref<1x128xf32, #tpu.memory_space<vmem>>, %arg11: memref<1x128xf32, #tpu.memory_space<vmem>>, %arg12: memref<128x128xf32, #tpu.memory_space<vmem>>, %arg13: memref<128x128xf32, #tpu.memory_space<vmem>>, %arg14: memref<128x128xf32, #tpu.memory_space<vmem>>, %arg15: memref<1x128xf32, #tpu.memory_space<vmem>>, %arg16: memref<16x128xf32, #tpu.memory_space<vmem>>, %arg17: memref<16x128xf32, #tpu.memory_space<vmem>>, %arg18: memref<16x128xf32, #tpu.memory_space<vmem>>, %arg19: memref<16x128xf32, #tpu.memory_space<vmem>>) attributes {dimension_semantics = [#tpu.dimension_semantics<parallel>, #tpu.dimension_semantics<arbitrary>], iteration_bounds = array<i64: 1, 1>, scalar_prefetch = 0 : i64, scratch_operands = 3 : i64, tpu.core_type = #tpu.core_type<tc>, window_params = [{transform_indices = @transform_0, window_bounds = array<i64: 16, 128>}, {transform_indices = @transform_1, window_bounds = array<i64: 16, 128>}, {transform_indices = @transform_2, window_bounds = array<i64: 16, 128>}, {transform_indices = @transform_3, window_bounds = array<i64: 16, 128>}, {pipeline_mode = #tpu.pipeline_mode<synchronous>, transform_indices = @transform_4, window_bounds = array<i64: 128, 128>}, {pipeline_mode = #tpu.pipeline_mode<synchronous>, transform_indices = @transform_5, window_bounds = array<i64: 128, 128>}, {pipeline_mode = #tpu.pipeline_mode<synchronous>, transform_indices = @transform_6, window_bounds = array<i64: 128, 128>}, {pipeline_mode = #tpu.pipeline_mode<synchronous>, transform_indices = @transform_7, window_bounds = array<i64: 1, 128>}, {pipeline_mode = #tpu.pipeline_mode<synchronous>, transform_indices = @transform_8, window_bounds = array<i64: 1, 128>}, {pipeline_mode = #tpu.pipeline_mode<synchronous>, transform_indices = @transform_9, window_bounds = array<i64: 1, 128>}, {transform_indices = @transform_10, window_bounds = array<i64: 128, 128>}, {transform_indices = @transform_11, window_bounds = array<i64: 128, 128>}, {transform_indices = @transform_12, window_bounds = array<i64: 128, 128>}, {transform_indices = @transform_13, window_bounds = array<i64: 1, 128>}, {transform_indices = @transform_14, window_bounds = array<i64: 16, 128>}]} {
    %c0_i32 = arith.constant 0 : i32
    %0 = arith.cmpi eq, %arg1, %c0_i32 : i32
    %1 = arith.extui %0 : i1 to i32
    %c0_i32_0 = arith.constant 0 : i32
    %2 = arith.cmpi ne, %1, %c0_i32_0 : i32
    scf.if %2 {
      %c0_20 = arith.constant 0 : index
      %c0_21 = arith.constant 0 : index
      %20 = vector.load %arg2[%c0_20, %c0_21] : memref<16x128xf32, #tpu.memory_space<vmem>>, vector<16x128xf32>
      %c0_22 = arith.constant 0 : index
      %c0_23 = arith.constant 0 : index
      %21 = vector.load %arg6[%c0_22, %c0_23] : memref<128x128xf32, #tpu.memory_space<vmem>>, vector<128x128xf32>
      %cst_24 = arith.constant dense<0.000000e+00> : vector<16x128xf32>
      %22 = tpu.matmul %20, %21, %cst_24 {dimension_numbers = #tpu.dot_dimension_numbers<[1], [0], [0], [1], [0, 0, 1, 1], [], []>} : vector<16x128xf32>, vector<128x128xf32>, vector<16x128xf32> -> vector<16x128xf32>
      %c0_25 = arith.constant 0 : index
      %c0_26 = arith.constant 0 : index
      %23 = vector.load %arg9[%c0_25, %c0_26] : memref<1x128xf32, #tpu.memory_space<vmem>>, vector<1x128xf32>
      %24 = vector.broadcast %23 : vector<1x128xf32> to vector<16x128xf32>
      %25 = arith.addf %22, %24 : vector<16x128xf32>
      %cst_27 = arith.constant 0.000000e+00 : f32
      %26 = vector.broadcast %cst_27 : f32 to vector<16x128xf32>
      %27 = arith.cmpf oge, %25, %26 : vector<16x128xf32>
      %cst_28 = arith.constant 1.000000e-01 : f32
      %28 = vector.broadcast %cst_28 : f32 to vector<16x128xf32>
      %29 = arith.mulf %28, %25 : vector<16x128xf32>
      %30 = arith.select %27, %25, %29 : vector<16x128xi1>, vector<16x128xf32>
      %c0_29 = arith.constant 0 : index
      %c0_30 = arith.constant 0 : index
      %31 = vector.load %arg17[%c0_29, %c0_30] : memref<16x128xf32, #tpu.memory_space<vmem>>, vector<16x128xf32>
      tpu.vector_store %arg17[%c0_29, %c0_30], %30 {strides = array<i32>} : memref<16x128xf32, #tpu.memory_space<vmem>>, vector<16x128xf32>,
      %c0_31 = arith.constant 0 : index
      %c0_32 = arith.constant 0 : index
      %32 = vector.load %arg3[%c0_31, %c0_32] : memref<16x128xf32, #tpu.memory_space<vmem>>, vector<16x128xf32>
      %c0_33 = arith.constant 0 : index
      %c0_34 = arith.constant 0 : index
      %33 = vector.load %arg7[%c0_33, %c0_34] : memref<128x128xf32, #tpu.memory_space<vmem>>, vector<128x128xf32>
      %cst_35 = arith.constant dense<0.000000e+00> : vector<16x128xf32>
      %34 = tpu.matmul %32, %33, %cst_35 {dimension_numbers = #tpu.dot_dimension_numbers<[1], [0], [0], [1], [0, 0, 1, 1], [], []>} : vector<16x128xf32>, vector<128x128xf32>, vector<16x128xf32> -> vector<16x128xf32>
      %c0_36 = arith.constant 0 : index
      %c0_37 = arith.constant 0 : index
      %35 = vector.load %arg10[%c0_36, %c0_37] : memref<1x128xf32, #tpu.memory_space<vmem>>, vector<1x128xf32>
      %36 = vector.broadcast %35 : vector<1x128xf32> to vector<16x128xf32>
      %37 = arith.addf %34, %36 : vector<16x128xf32>
      %cst_38 = arith.constant 0.000000e+00 : f32
      %38 = vector.broadcast %cst_38 : f32 to vector<16x128xf32>
      %39 = arith.cmpf oge, %37, %38 : vector<16x128xf32>
      %cst_39 = arith.constant 1.000000e-01 : f32
      %40 = vector.broadcast %cst_39 : f32 to vector<16x128xf32>
      %41 = arith.mulf %40, %37 : vector<16x128xf32>
      %42 = arith.select %39, %37, %41 : vector<16x128xi1>, vector<16x128xf32>
      %c0_40 = arith.constant 0 : index
      %c0_41 = arith.constant 0 : index
      %43 = vector.load %arg18[%c0_40, %c0_41] : memref<16x128xf32, #tpu.memory_space<vmem>>, vector<16x128xf32>
      tpu.vector_store %arg18[%c0_40, %c0_41], %42 {strides = array<i32>} : memref<16x128xf32, #tpu.memory_space<vmem>>, vector<16x128xf32>,
      %c0_42 = arith.constant 0 : index
      %c0_43 = arith.constant 0 : index
      %44 = vector.load %arg4[%c0_42, %c0_43] : memref<16x128xf32, #tpu.memory_space<vmem>>, vector<16x128xf32>
      %c0_44 = arith.constant 0 : index
      %c0_45 = arith.constant 0 : index
      %45 = vector.load %arg8[%c0_44, %c0_45] : memref<128x128xf32, #tpu.memory_space<vmem>>, vector<128x128xf32>
      %cst_46 = arith.constant dense<0.000000e+00> : vector<16x128xf32>
      %46 = tpu.matmul %44, %45, %cst_46 {dimension_numbers = #tpu.dot_dimension_numbers<[1], [0], [0], [1], [0, 0, 1, 1], [], []>} : vector<16x128xf32>, vector<128x128xf32>, vector<16x128xf32> -> vector<16x128xf32>
      %c0_47 = arith.constant 0 : index
      %c0_48 = arith.constant 0 : index
      %47 = vector.load %arg11[%c0_47, %c0_48] : memref<1x128xf32, #tpu.memory_space<vmem>>, vector<1x128xf32>
      %48 = vector.broadcast %47 : vector<1x128xf32> to vector<16x128xf32>
      %49 = arith.addf %46, %48 : vector<16x128xf32>
      %cst_49 = arith.constant 0.000000e+00 : f32
      %50 = vector.broadcast %cst_49 : f32 to vector<16x128xf32>
      %51 = arith.cmpf oge, %49, %50 : vector<16x128xf32>
      %cst_50 = arith.constant 1.000000e-01 : f32
      %52 = vector.broadcast %cst_50 : f32 to vector<16x128xf32>
      %53 = arith.mulf %52, %49 : vector<16x128xf32>
      %54 = arith.select %51, %49, %53 : vector<16x128xi1>, vector<16x128xf32>
      %c0_51 = arith.constant 0 : index
      %c0_52 = arith.constant 0 : index
      %55 = vector.load %arg19[%c0_51, %c0_52] : memref<16x128xf32, #tpu.memory_space<vmem>>, vector<16x128xf32>
      tpu.vector_store %arg19[%c0_51, %c0_52], %54 {strides = array<i32>} : memref<16x128xf32, #tpu.memory_space<vmem>>, vector<16x128xf32>,
    } else {
    }
    %c0 = arith.constant 0 : index
    %c0_1 = arith.constant 0 : index
    %3 = vector.load %arg17[%c0, %c0_1] : memref<16x128xf32, #tpu.memory_space<vmem>>, vector<16x128xf32>
    %c0_2 = arith.constant 0 : index
    %c0_3 = arith.constant 0 : index
    %4 = vector.load %arg12[%c0_2, %c0_3] : memref<128x128xf32, #tpu.memory_space<vmem>>, vector<128x128xf32>
    %cst = arith.constant dense<0.000000e+00> : vector<16x128xf32>
    %5 = tpu.matmul %3, %4, %cst {dimension_numbers = #tpu.dot_dimension_numbers<[1], [0], [0], [1], [0, 0, 1, 1], [], []>} : vector<16x128xf32>, vector<128x128xf32>, vector<16x128xf32> -> vector<16x128xf32>
    %c0_4 = arith.constant 0 : index
    %c0_5 = arith.constant 0 : index
    %6 = vector.load %arg18[%c0_4, %c0_5] : memref<16x128xf32, #tpu.memory_space<vmem>>, vector<16x128xf32>
    %c0_6 = arith.constant 0 : index
    %c0_7 = arith.constant 0 : index
    %7 = vector.load %arg13[%c0_6, %c0_7] : memref<128x128xf32, #tpu.memory_space<vmem>>, vector<128x128xf32>
    %cst_8 = arith.constant dense<0.000000e+00> : vector<16x128xf32>
    %8 = tpu.matmul %6, %7, %cst_8 {dimension_numbers = #tpu.dot_dimension_numbers<[1], [0], [0], [1], [0, 0, 1, 1], [], []>} : vector<16x128xf32>, vector<128x128xf32>, vector<16x128xf32> -> vector<16x128xf32>
    %9 = arith.addf %5, %8 : vector<16x128xf32>
    %c0_9 = arith.constant 0 : index
    %c0_10 = arith.constant 0 : index
    %10 = vector.load %arg19[%c0_9, %c0_10] : memref<16x128xf32, #tpu.memory_space<vmem>>, vector<16x128xf32>
    %c0_11 = arith.constant 0 : index
    %c0_12 = arith.constant 0 : index
    %11 = vector.load %arg14[%c0_11, %c0_12] : memref<128x128xf32, #tpu.memory_space<vmem>>, vector<128x128xf32>
    %cst_13 = arith.constant dense<0.000000e+00> : vector<16x128xf32>
    %12 = tpu.matmul %10, %11, %cst_13 {dimension_numbers = #tpu.dot_dimension_numbers<[1], [0], [0], [1], [0, 0, 1, 1], [], []>} : vector<16x128xf32>, vector<128x128xf32>, vector<16x128xf32> -> vector<16x128xf32>
    %13 = arith.addf %9, %12 : vector<16x128xf32>
    %c0_14 = arith.constant 0 : index
    %c0_15 = arith.constant 0 : index
    %14 = vector.load %arg15[%c0_14, %c0_15] : memref<1x128xf32, #tpu.memory_space<vmem>>, vector<1x128xf32>
    %15 = vector.broadcast %14 : vector<1x128xf32> to vector<16x128xf32>
    %16 = arith.addf %13, %15 : vector<16x128xf32>
    %c0_16 = arith.constant 0 : index
    %c0_17 = arith.constant 0 : index
    %17 = vector.load %arg5[%c0_16, %c0_17] : memref<16x128xf32, #tpu.memory_space<vmem>>, vector<16x128xf32>
    %18 = arith.addf %16, %17 : vector<16x128xf32>
    %c0_18 = arith.constant 0 : index
    %c0_19 = arith.constant 0 : index
    %19 = vector.load %arg16[%c0_18, %c0_19] : memref<16x128xf32, #tpu.memory_space<vmem>>, vector<16x128xf32>
    tpu.vector_store %arg16[%c0_18, %c0_19], %18 {strides = array<i32>} : memref<16x128xf32, #tpu.memory_space<vmem>>, vector<16x128xf32>,
    return
  }
  func.func @transform_0(%arg0: i32, %arg1: i32) -> (i32, i32) {
    %c0_i32 = arith.constant 0 : i32
    %c0_i32_0 = arith.constant 0 : i32
    return %arg0, %c0_i32 : i32, i32
  }
  func.func @transform_1(%arg0: i32, %arg1: i32) -> (i32, i32) {
    %c0_i32 = arith.constant 0 : i32
    %c0_i32_0 = arith.constant 0 : i32
    return %arg0, %c0_i32 : i32, i32
  }
  func.func @transform_2(%arg0: i32, %arg1: i32) -> (i32, i32) {
    %c0_i32 = arith.constant 0 : i32
    %c0_i32_0 = arith.constant 0 : i32
    return %arg0, %c0_i32 : i32, i32
  }
  func.func @transform_3(%arg0: i32, %arg1: i32) -> (i32, i32) {
    %c0_i32 = arith.constant 0 : i32
    return %arg0, %arg1 : i32, i32
  }
  func.func @transform_4(%arg0: i32, %arg1: i32) -> (i32, i32) {
    %c0_i32 = arith.constant 0 : i32
    %c0_i32_0 = arith.constant 0 : i32
    %c0_i32_1 = arith.constant 0 : i32
    return %c0_i32, %c0_i32_0 : i32, i32
  }
  func.func @transform_5(%arg0: i32, %arg1: i32) -> (i32, i32) {
    %c0_i32 = arith.constant 0 : i32
    %c0_i32_0 = arith.constant 0 : i32
    %c0_i32_1 = arith.constant 0 : i32
    return %c0_i32, %c0_i32_0 : i32, i32
  }
  func.func @transform_6(%arg0: i32, %arg1: i32) -> (i32, i32) {
    %c0_i32 = arith.constant 0 : i32
    %c0_i32_0 = arith.constant 0 : i32
    %c0_i32_1 = arith.constant 0 : i32
    return %c0_i32, %c0_i32_0 : i32, i32
  }
  func.func @transform_7(%arg0: i32, %arg1: i32) -> (i32, i32) {
    %c0_i32 = arith.constant 0 : i32
    %c0_i32_0 = arith.constant 0 : i32
    %c0_i32_1 = arith.constant 0 : i32
    return %c0_i32, %c0_i32_0 : i32, i32
  }
  func.func @transform_8(%arg0: i32, %arg1: i32) -> (i32, i32) {
    %c0_i32 = arith.constant 0 : i32
    %c0_i32_0 = arith.constant 0 : i32
    %c0_i32_1 = arith.constant 0 : i32
    return %c0_i32, %c0_i32_0 : i32, i32
  }
  func.func @transform_9(%arg0: i32, %arg1: i32) -> (i32, i32) {
    %c0_i32 = arith.constant 0 : i32
    %c0_i32_0 = arith.constant 0 : i32
    %c0_i32_1 = arith.constant 0 : i32
    return %c0_i32, %c0_i32_0 : i32, i32
  }
  func.func @transform_10(%arg0: i32, %arg1: i32) -> (i32, i32) {
    %c0_i32 = arith.constant 0 : i32
    %c0_i32_0 = arith.constant 0 : i32
    return %c0_i32, %arg1 : i32, i32
  }
  func.func @transform_11(%arg0: i32, %arg1: i32) -> (i32, i32) {
    %c0_i32 = arith.constant 0 : i32
    %c0_i32_0 = arith.constant 0 : i32
    return %c0_i32, %arg1 : i32, i32
  }
  func.func @transform_12(%arg0: i32, %arg1: i32) -> (i32, i32) {
    %c0_i32 = arith.constant 0 : i32
    %c0_i32_0 = arith.constant 0 : i32
    return %c0_i32, %arg1 : i32, i32
  }
  func.func @transform_13(%arg0: i32, %arg1: i32) -> (i32, i32) {
    %c0_i32 = arith.constant 0 : i32
    %c0_i32_0 = arith.constant 0 : i32
    return %c0_i32, %arg1 : i32, i32
  }
  func.func @transform_14(%arg0: i32, %arg1: i32) -> (i32, i32) {
    %c0_i32 = arith.constant 0 : i32
    return %arg0, %arg1 : i32, i32
  }
}

</mosaic_0001>

<llo_original>
// kernel: tpu_custom_call.1
$region0: #{tpu_custom_call.1}
  #allocation0 [shape = 'u32[]', space=smem, size = 0x4, offset = 0x4, fixed_abs, tag = 'smem constant byte address 0x4 - core index']
  #allocation1 [shape = 'u32[144,128]{1,0:T(1,128)}', space=vmem, size = 0x12000, scoped, tag = 'internal scratch']
  #allocation2 [shape = 'f32[16,128]{1,0:T(8,128)}', space=vmem, size = 0x2000, scoped, tag = 'scratch operand']
  #allocation3 [shape = 'f32[16,128]{1,0:T(8,128)}', space=vmem, size = 0x2000, scoped, tag = 'scratch operand']
  #allocation4 [shape = 'f32[16,128]{1,0:T(8,128)}', space=vmem, size = 0x2000, scoped, tag = 'scratch operand']
  %s0 = inlined_call_operand.hbm [shape: f32[16,128], index: 0, kind: input, shape index: {}]
  %s1 = inlined_call_operand.hbm [shape: f32[16,128], index: 1, kind: input, shape index: {}]
  %s2 = inlined_call_operand.hbm [shape: f32[16,128], index: 2, kind: input, shape index: {}]
  %s3 = inlined_call_operand.hbm [shape: f32[16,128], index: 3, kind: input, shape index: {}]
  %s4 = inlined_call_operand.hbm [shape: f32[128,128], index: 4, kind: input, shape index: {}]
  %s5 = inlined_call_operand.hbm [shape: f32[128,128], index: 5, kind: input, shape index: {}]
  %s6 = inlined_call_operand.hbm [shape: f32[128,128], index: 6, kind: input, shape index: {}]
  %s7 = inlined_call_operand.vmem [shape: f32[1,128], index: 7, kind: input, shape index: {}]
  %s8 = inlined_call_operand.vmem [shape: f32[1,128], index: 8, kind: input, shape index: {}]
  %s9 = inlined_call_operand.vmem [shape: f32[1,128], index: 9, kind: input, shape index: {}]
  %s10 = inlined_call_operand.hbm [shape: f32[128,128], index: 10, kind: input, shape index: {}]
  %s11 = inlined_call_operand.hbm [shape: f32[128,128], index: 11, kind: input, shape index: {}]
  %s12 = inlined_call_operand.hbm [shape: f32[128,128], index: 12, kind: input, shape index: {}]
  %s13 = inlined_call_operand.vmem [shape: f32[1,128], index: 13, kind: input, shape index: {}]
  %s14 = inlined_call_operand.hbm [shape: f32[16,128], index: 14, kind: output, shape index: {}]
  %s15 = sld [smem:[#allocation0]]
  $region110: #{tpu_custom_call.1} parent=0
    _
  %s17 = ssub.s32 1, %s15
  %s18 = scalar_select 0, %s17, %s15
  $region1: #{tpu_custom_call.1} parent=0
    #allocation5 [shape = 'u8[8192]{0}', space=vmem, size = 0x2000, scoped, tag = 'input window, operand 0, single buffered']
    #allocation6 [shape = 's32[1]{0}', space=sflag, size = 0x4, scoped, tag = 'scoped memory for tpu_custom_call.1']
    #allocation7 [shape = 's32[1]{0}', space=sflag, size = 0x4, scoped, tag = 'scoped memory for tpu_custom_call.1']
    #allocation8 [shape = 'u8[8192]{0}', space=vmem, size = 0x2000, scoped, tag = 'input window, operand 1, single buffered']
    #allocation9 [shape = 's32[1]{0}', space=sflag, size = 0x4, scoped, tag = 'scoped memory for tpu_custom_call.1']
    #allocation10 [shape = 'u8[8192]{0}', space=vmem, size = 0x2000, scoped, tag = 'input window, operand 2, single buffered']
    #allocation11 [shape = 'u8[8192]{0}', space=vmem, size = 0x2000, scoped, tag = 'input window, operand 3, single buffered']
    #allocation12 [shape = 's32[1]{0}', space=sflag, size = 0x4, scoped, tag = 'scoped memory for tpu_custom_call.1']
    #allocation13 [shape = 'u8[65536]{0}', space=vmem, size = 0x10000, scoped, tag = 'input window, operand 4, single buffered']
    #allocation14 [shape = 'u8[65536]{0}', space=vmem, size = 0x10000, scoped, tag = 'input window, operand 5, single buffered']
    #allocation15 [shape = 's32[1]{0}', space=sflag, size = 0x4, scoped, tag = 'scoped memory for tpu_custom_call.1']
    #allocation16 [shape = 'u8[65536]{0}', space=vmem, size = 0x10000, scoped, tag = 'input window, operand 6, single buffered']
    #allocation17 [shape = 'u8[65536]{0}', space=vmem, size = 0x10000, scoped, tag = 'input window, operand 10, single buffered']
    #allocation18 [shape = 's32[1]{0}', space=sflag, size = 0x4, scoped, tag = 'scoped memory for tpu_custom_call.1']
    #allocation19 [shape = 'u8[65536]{0}', space=vmem, size = 0x10000, scoped, tag = 'input window, operand 11, single buffered']
    #allocation20 [shape = 'u8[65536]{0}', space=vmem, size = 0x10000, scoped, tag = 'input window, operand 12, single buffered']
    #allocation21 [shape = 's32[1]{0}', space=sflag, size = 0x4, scoped, tag = 'scoped memory for tpu_custom_call.1']
    #allocation22 [shape = 'u8[8192]{0}', space=vmem, size = 0x2000, scoped, tag = 'output window, operand 0, single buffered']
    %19 = vsyncpa [#allocation6], 0
    %20 = vsyncpa [#allocation9], 0
    %21 = vsyncpa [#allocation12], 0
    %22 = vsyncpa [#allocation15], 0
    %23 = vsyncpa [#allocation18], 0
    %24 = vsyncpa [#allocation21], 0
    %25 = vsyncpa [#allocation7], 0
    // Predicated region
    $region2: #{tpu_custom_call.1} parent=1 // pred_check
      _
    $region3: #{tpu_custom_call.1} parent=1 // pred_check_branch
      %27 = sbr.rel (0) target = $region5
    $region4: #{tpu_custom_call.1} parent=1 // pred_region
      %s29 = ssub.s32 256, 256
      %30 = vsyncadd [#allocation6], %s29
      %s31 = sshll.u32 [#allocation5], 4
      %s32 = int_to_ptr.vmem [resolvable:$true] %s31
      %37 = dma.hbm_to_vmem [thread:$0]  %s0, 256, %s32, [#allocation6], 128, 128, 8
    $region5: #{tpu_custom_call.1} parent=1 // pred_fallthru
      _
    // Predicated region
    $region6: #{tpu_custom_call.1} parent=1 // pred_check
      _
    $region7: #{tpu_custom_call.1} parent=1 // pred_check_branch
      %39 = sbr.rel (0) target = $region9
    $region8: #{tpu_custom_call.1} parent=1 // pred_region
      %s41 = ssub.s32 256, 256
      %42 = vsyncadd [#allocation9], %s41
      %s43 = sshll.u32 [#allocation8], 4
      %s44 = int_to_ptr.vmem [resolvable:$true] %s43
      %49 = dma.hbm_to_vmem [thread:$0]  %s1, 256, %s44, [#allocation9], 128, 128, 8
    $region9: #{tpu_custom_call.1} parent=1 // pred_fallthru
      _
    // Predicated region
    $region10: #{tpu_custom_call.1} parent=1 // pred_check
      _
    $region11: #{tpu_custom_call.1} parent=1 // pred_check_branch
      %51 = sbr.rel (0) target = $region13
    $region12: #{tpu_custom_call.1} parent=1 // pred_region
      %s53 = ssub.s32 256, 256
      %54 = vsyncadd [#allocation9], %s53
      %s55 = sshll.u32 [#allocation10], 4
      %s56 = int_to_ptr.vmem [resolvable:$true] %s55
      %61 = dma.hbm_to_vmem [thread:$0]  %s2, 256, %s56, [#allocation9], 128, 128, 8
    $region13: #{tpu_custom_call.1} parent=1 // pred_fallthru
      _
    // Predicated region
    $region14: #{tpu_custom_call.1} parent=1 // pred_check
      _
    $region15: #{tpu_custom_call.1} parent=1 // pred_check_branch
      %63 = sbr.rel (0) target = $region17
    $region16: #{tpu_custom_call.1} parent=1 // pred_region
      %s65 = ssub.s32 256, 256
      %66 = vsyncadd [#allocation12], %s65
      %s67 = sshll.u32 [#allocation11], 4
      %s68 = int_to_ptr.vmem [resolvable:$true] %s67
      %73 = dma.hbm_to_vmem [thread:$0]  %s3, 256, %s68, [#allocation12], 128, 128, 8
    $region17: #{tpu_custom_call.1} parent=1 // pred_fallthru
      _
    // Predicated region
    $region18: #{tpu_custom_call.1} parent=1 // pred_check
      _
    $region19: #{tpu_custom_call.1} parent=1 // pred_check_branch
      %75 = sbr.rel (0) target = $region21
    $region20: #{tpu_custom_call.1} parent=1 // pred_region
      %s77 = ssub.s32 2048, 2048
      %78 = vsyncadd [#allocation12], %s77
      %s79 = sshll.u32 [#allocation13], 4
      %s80 = int_to_ptr.vmem [resolvable:$true] %s79
      %85 = dma.hbm_to_vmem [thread:$0]  %s4, 2048, %s80, [#allocation12], 128, 128, 8
    $region21: #{tpu_custom_call.1} parent=1 // pred_fallthru
      _
    // Predicated region
    $region22: #{tpu_custom_call.1} parent=1 // pred_check
      _
    $region23: #{tpu_custom_call.1} parent=1 // pred_check_branch
      %87 = sbr.rel (0) target = $region25
    $region24: #{tpu_custom_call.1} parent=1 // pred_region
      %s89 = ssub.s32 2048, 2048
      %90 = vsyncadd [#allocation15], %s89
      %s91 = sshll.u32 [#allocation14], 4
      %s92 = int_to_ptr.vmem [resolvable:$true] %s91
      %97 = dma.hbm_to_vmem [thread:$0]  %s5, 2048, %s92, [#allocation15], 128, 128, 8
    $region25: #{tpu_custom_call.1} parent=1 // pred_fallthru
      _
    // Predicated region
    $region26: #{tpu_custom_call.1} parent=1 // pred_check
      _
    $region27: #{tpu_custom_call.1} parent=1 // pred_check_branch
      %99 = sbr.rel (0) target = $region29
    $region28: #{tpu_custom_call.1} parent=1 // pred_region
      %s101 = ssub.s32 2048, 2048
      %102 = vsyncadd [#allocation15], %s101
      %s103 = sshll.u32 [#allocation16], 4
      %s104 = int_to_ptr.vmem [resolvable:$true] %s103
      %109 = dma.hbm_to_vmem [thread:$0]  %s6, 2048, %s104, [#allocation15], 128, 128, 8
    $region29: #{tpu_custom_call.1} parent=1 // pred_fallthru
      _
    // Predicated region
    $region30: #{tpu_custom_call.1} parent=1 // pred_check
      _
    $region31: #{tpu_custom_call.1} parent=1 // pred_check_branch
      %111 = sbr.rel (0) target = $region33
    $region32: #{tpu_custom_call.1} parent=1 // pred_region
      _
    $region33: #{tpu_custom_call.1} parent=1 // pred_fallthru
      _
    // Predicated region
    $region34: #{tpu_custom_call.1} parent=1 // pred_check
      _
    $region35: #{tpu_custom_call.1} parent=1 // pred_check_branch
      %113 = sbr.rel (0) target = $region37
    $region36: #{tpu_custom_call.1} parent=1 // pred_region
      _
    $region37: #{tpu_custom_call.1} parent=1 // pred_fallthru
      _
    // Predicated region
    $region38: #{tpu_custom_call.1} parent=1 // pred_check
      _
    $region39: #{tpu_custom_call.1} parent=1 // pred_check_branch
      %115 = sbr.rel (0) target = $region41
    $region40: #{tpu_custom_call.1} parent=1 // pred_region
      _
    $region41: #{tpu_custom_call.1} parent=1 // pred_fallthru
      _
    // Predicated region
    $region42: #{tpu_custom_call.1} parent=1 // pred_check
      _
    $region43: #{tpu_custom_call.1} parent=1 // pred_check_branch
      %117 = sbr.rel (0) target = $region45
    $region44: #{tpu_custom_call.1} parent=1 // pred_region
      %s119 = ssub.s32 2048, 2048
      %120 = vsyncadd [#allocation18], %s119
      %s121 = sshll.u32 [#allocation17], 4
      %s122 = int_to_ptr.vmem [resolvable:$true] %s121
      %127 = dma.hbm_to_vmem [thread:$0]  %s10, 2048, %s122, [#allocation18], 128, 128, 8
    $region45: #{tpu_custom_call.1} parent=1 // pred_fallthru
      _
    // Predicated region
    $region46: #{tpu_custom_call.1} parent=1 // pred_check
      _
    $region47: #{tpu_custom_call.1} parent=1 // pred_check_branch
      %129 = sbr.rel (0) target = $region49
    $region48: #{tpu_custom_call.1} parent=1 // pred_region
      %s131 = ssub.s32 2048, 2048
      %132 = vsyncadd [#allocation18], %s131
      %s133 = sshll.u32 [#allocation19], 4
      %s134 = int_to_ptr.vmem [resolvable:$true] %s133
      %139 = dma.hbm_to_vmem [thread:$0]  %s11, 2048, %s134, [#allocation18], 128, 128, 8
    $region49: #{tpu_custom_call.1} parent=1 // pred_fallthru
      _
    // Predicated region
    $region50: #{tpu_custom_call.1} parent=1 // pred_check
      _
    $region51: #{tpu_custom_call.1} parent=1 // pred_check_branch
      %141 = sbr.rel (0) target = $region53
    $region52: #{tpu_custom_call.1} parent=1 // pred_region
      %s143 = ssub.s32 2048, 2048
      %144 = vsyncadd [#allocation21], %s143
      %s145 = sshll.u32 [#allocation20], 4
      %s146 = int_to_ptr.vmem [resolvable:$true] %s145
      %151 = dma.hbm_to_vmem [thread:$0]  %s12, 2048, %s146, [#allocation21], 128, 128, 8
    $region53: #{tpu_custom_call.1} parent=1 // pred_fallthru
      _
    // Predicated region
    $region54: #{tpu_custom_call.1} parent=1 // pred_check
      _
    $region55: #{tpu_custom_call.1} parent=1 // pred_check_branch
      %153 = sbr.rel (0) target = $region57
    $region56: #{tpu_custom_call.1} parent=1 // pred_region
      _
    $region57: #{tpu_custom_call.1} parent=1 // pred_fallthru
      _
    // Predicated region
    $region58: #{tpu_custom_call.1} parent=1 // pred_check
      _
    $region59: #{tpu_custom_call.1} parent=1 // pred_check_branch
      %155 = sbr.rel (0) target = $region61
    $region60: #{tpu_custom_call.1} parent=1 // pred_region
      %156 = dma.done [#allocation6], 256
    $region61: #{tpu_custom_call.1} parent=1 // pred_fallthru
      _
    // Predicated region
    $region62: #{tpu_custom_call.1} parent=1 // pred_check
      _
    $region63: #{tpu_custom_call.1} parent=1 // pred_check_branch
      %158 = sbr.rel (0) target = $region65
    $region64: #{tpu_custom_call.1} parent=1 // pred_region
      %159 = dma.done [#allocation9], 256
    $region65: #{tpu_custom_call.1} parent=1 // pred_fallthru
      _
    // Predicated region
    $region66: #{tpu_custom_call.1} parent=1 // pred_check
      _
    $region67: #{tpu_custom_call.1} parent=1 // pred_check_branch
      %161 = sbr.rel (0) target = $region69
    $region68: #{tpu_custom_call.1} parent=1 // pred_region
      %162 = dma.done [#allocation9], 256
    $region69: #{tpu_custom_call.1} parent=1 // pred_fallthru
      _
    // Predicated region
    $region70: #{tpu_custom_call.1} parent=1 // pred_check
      _
    $region71: #{tpu_custom_call.1} parent=1 // pred_check_branch
      %164 = sbr.rel (0) target = $region73
    $region72: #{tpu_custom_call.1} parent=1 // pred_region
      %165 = dma.done [#allocation12], 256
    $region73: #{tpu_custom_call.1} parent=1 // pred_fallthru
      _
    // Predicated region
    $region74: #{tpu_custom_call.1} parent=1 // pred_check
      _
    $region75: #{tpu_custom_call.1} parent=1 // pred_check_branch
      %167 = sbr.rel (0) target = $region77
    $region76: #{tpu_custom_call.1} parent=1 // pred_region
      %168 = dma.done [#allocation12], 2048
    $region77: #{tpu_custom_call.1} parent=1 // pred_fallthru
      _
    // Predicated region
    $region78: #{tpu_custom_call.1} parent=1 // pred_check
      _
    $region79: #{tpu_custom_call.1} parent=1 // pred_check_branch
      %170 = sbr.rel (0) target = $region81
    $region80: #{tpu_custom_call.1} parent=1 // pred_region
      %171 = dma.done [#allocation15], 2048
    $region81: #{tpu_custom_call.1} parent=1 // pred_fallthru
      _
    // Predicated region
    $region82: #{tpu_custom_call.1} parent=1 // pred_check
      _
    $region83: #{tpu_custom_call.1} parent=1 // pred_check_branch
      %173 = sbr.rel (0) target = $region85
    $region84: #{tpu_custom_call.1} parent=1 // pred_region
      %174 = dma.done [#allocation15], 2048
    $region85: #{tpu_custom_call.1} parent=1 // pred_fallthru
      _
    // Predicated region
    $region86: #{tpu_custom_call.1} parent=1 // pred_check
      _
    $region87: #{tpu_custom_call.1} parent=1 // pred_check_branch
      %176 = sbr.rel (0) target = $region89
    $region88: #{tpu_custom_call.1} parent=1 // pred_region
      %177 = dma.done [#allocation18], 2048
    $region89: #{tpu_custom_call.1} parent=1 // pred_fallthru
      _
    // Predicated region
    $region90: #{tpu_custom_call.1} parent=1 // pred_check
      _
    $region91: #{tpu_custom_call.1} parent=1 // pred_check_branch
      %179 = sbr.rel (0) target = $region93
    $region92: #{tpu_custom_call.1} parent=1 // pred_region
      %180 = dma.done [#allocation18], 2048
    $region93: #{tpu_custom_call.1} parent=1 // pred_fallthru
      _
    // Predicated region
    $region94: #{tpu_custom_call.1} parent=1 // pred_check
      _
    $region95: #{tpu_custom_call.1} parent=1 // pred_check_branch
      %182 = sbr.rel (0) target = $region97
    $region96: #{tpu_custom_call.1} parent=1 // pred_region
      %183 = dma.done [#allocation21], 2048
    $region97: #{tpu_custom_call.1} parent=1 // pred_fallthru
      _
    %p184 = scmp.eq.s32.totalorder 0, 0
    // Predicated region
    $region98: #{tpu_custom_call.1} parent=1 // pred_check
      %p185 = pneg %p184
    $region99: #{tpu_custom_call.1} parent=1 // pred_check_branch
      %187 = sbr.rel (%p185) target = $region101
    $region100: #{tpu_custom_call.1} parent=1 // pred_region
      %v188 = vld [vmem:[#allocation5] sm:$0xff]
      %v189 = vld [vmem:[#allocation5 + $0x8] sm:$0xff]
      %v190 = vld [vmem:[#allocation13] sm:$0xff]
      %v191 = vld [vmem:[#allocation13 + $0x8] sm:$0xff]
      %v192 = vld [vmem:[#allocation13 + $0x10] sm:$0xff]
      %v193 = vld [vmem:[#allocation13 + $0x18] sm:$0xff]
      %v194 = vld [vmem:[#allocation13 + $0x20] sm:$0xff]
      %v195 = vld [vmem:[#allocation13 + $0x28] sm:$0xff]
      %v196 = vld [vmem:[#allocation13 + $0x30] sm:$0xff]
      %v197 = vld [vmem:[#allocation13 + $0x38] sm:$0xff]
      %v198 = vld [vmem:[#allocation13 + $0x40] sm:$0xff]
      %v199 = vld [vmem:[#allocation13 + $0x48] sm:$0xff]
      %v200 = vld [vmem:[#allocation13 + $0x50] sm:$0xff]
      %v201 = vld [vmem:[#allocation13 + $0x58] sm:$0xff]
      %v202 = vld [vmem:[#allocation13 + $0x60] sm:$0xff]
      %v203 = vld [vmem:[#allocation13 + $0x68] sm:$0xff]
      %v204 = vld [vmem:[#allocation13 + $0x70] sm:$0xff]
      %v205 = vld [vmem:[#allocation13 + $0x78] sm:$0xff]
      %v206 = vld [vmem:[%s7] sm:$0x1]
      %v208 = vlaneseq
      %v209 = vshrl.u32 %v208, 7
      %v210 = vsub.s32 0, %v209
      %v211 = vrot.slane %v206, %v210
      %213 = vmatprep.subr.mxu0 0.0
      %214 = vmatpush1.msra.mxu0 %v190
      %215 = vmatprep.subr.mxu0 0.0
      %216 = vmatpush1.msra.mxu0 %v191
      %217 = vmatprep.subr.mxu0 0.0
      %218 = vmatpush1.msra.mxu0 %v192
      %219 = vmatprep.subr.mxu0 0.0
      %220 = vmatpush1.msra.mxu0 %v193
      %221 = vmatprep.subr.mxu0 0.0
      %222 = vmatpush1.msra.mxu0 %v194
      %223 = vmatprep.subr.mxu0 0.0
      %224 = vmatpush1.msra.mxu0 %v195
      %225 = vmatprep.subr.mxu0 0.0
      %226 = vmatpush1.msra.mxu0 %v196
      %227 = vmatprep.subr.mxu0 0.0
      %228 = vmatpush1.msra.mxu0 %v197
      %229 = vmatprep.subr.mxu0 0.0
      %230 = vmatpush1.msra.mxu0 %v198
      %231 = vmatprep.subr.mxu0 0.0
      %232 = vmatpush1.msra.mxu0 %v199
      %233 = vmatprep.subr.mxu0 0.0
      %234 = vmatpush1.msra.mxu0 %v200
      %235 = vmatprep.subr.mxu0 0.0
      %236 = vmatpush1.msra.mxu0 %v201
      %237 = vmatprep.subr.mxu0 0.0
      %238 = vmatpush1.msra.mxu0 %v202
      %239 = vmatprep.subr.mxu0 0.0
      %240 = vmatpush1.msra.mxu0 %v203
      %241 = vmatprep.subr.mxu0 0.0
      %242 = vmatpush1.msra.mxu0 %v204
      %243 = vmatprep.subr.mxu0 0.0
      %244 = vmatpush1.msra.mxu0 %v205
      %245 = vmatprep.subr.mxu0 0.0
      %246 = vmatpush1.msra.mxu0 0.0
      %247 = vmatprep.subr.mxu0 0.0
      %248 = vmatpush1.msra.mxu0 0.0
      %249 = vmatprep.subr.mxu0 0.0
      %250 = vmatpush1.msra.mxu0 0.0
      %251 = vmatprep.subr.mxu0 0.0
      %252 = vmatpush1.msra.mxu0 0.0
      %253 = vmatprep.subr.mxu0 0.0
      %254 = vmatpush1.msra.mxu0 0.0
      %255 = vmatprep.subr.mxu0 0.0
      %256 = vmatpush1.msra.mxu0 0.0
      %257 = vmatprep.subr.mxu0 0.0
      %258 = vmatpush1.msra.mxu0 0.0
      %259 = vmatprep.subr.mxu0 0.0
      %260 = vmatpush1.msra.mxu0 0.0
      %261 = vmatprep.subr.mxu0 0.0
      %262 = vmatpush1.msra.mxu0 0.0
      %263 = vmatprep.subr.mxu0 0.0
      %264 = vmatpush1.msra.mxu0 0.0
      %265 = vmatprep.subr.mxu0 0.0
      %266 = vmatpush1.msra.mxu0 0.0
      %267 = vmatprep.subr.mxu0 0.0
      %268 = vmatpush1.msra.mxu0 0.0
      %269 = vmatprep.subr.mxu0 0.0
      %270 = vmatpush1.msra.mxu0 0.0
      %271 = vmatprep.subr.mxu0 0.0
      %272 = vmatpush1.msra.mxu0 0.0
      %273 = vmatprep.subr.mxu0 0.0
      %274 = vmatpush1.msra.mxu0 0.0
      %275 = vmatprep.subr.mxu0 0.0
      %276 = vmatpush1.msra.mxu0 0.0
      %277 = vmatprep.mubr.f32.mxu0 0.0
      %278 = vmatmul.mubr.f32.gmra.mrb[0].mxu0 %v188
      %v279 = vpop.f32.mrb[0].mxu0
      %v280 = vadd.f32 %v211, %v279
      %v281 = vpop.f32.mrb[0].mxu0
      %282 = vmatprep.mubr.f32.mxu0 0.0
      %283 = vmatmul.mubr.f32.gmra.mrb[0].mxu0 %v189
      %v284 = vpop.f32.mrb[0].mxu0
      %v285 = vadd.f32 %v211, %v284
      %v286 = vpop.f32.mrb[0].mxu0
      %287 = vdwg.mxu0
      %vm288 = vcmp.ge.f32.partialorder %v280, 0.0
      %vm289 = vcmp.ge.f32.partialorder %v285, 0.0
      %v290 = vmul.f32 %v280, 0.1
      %v291 = vmul.f32 %v285, 0.1
      %v292 = vsel %vm288, %v280, %v290
      %v293 = vsel %vm289, %v285, %v291
      %294 = vst [vmem:[#allocation2] sm:$0xff] %v292
      %295 = vst [vmem:[#allocation2 + $0x8] sm:$0xff] %v293
      %v296 = vld [vmem:[#allocation8] sm:$0xff]
      %v297 = vld [vmem:[#allocation8 + $0x8] sm:$0xff]
      %v298 = vld [vmem:[#allocation14] sm:$0xff]
      %v299 = vld [vmem:[#allocation14 + $0x8] sm:$0xff]
      %v300 = vld [vmem:[#allocation14 + $0x10] sm:$0xff]
      %v301 = vld [vmem:[#allocation14 + $0x18] sm:$0xff]
      %v302 = vld [vmem:[#allocation14 + $0x20] sm:$0xff]
      %v303 = vld [vmem:[#allocation14 + $0x28] sm:$0xff]
      %v304 = vld [vmem:[#allocation14 + $0x30] sm:$0xff]
      %v305 = vld [vmem:[#allocation14 + $0x38] sm:$0xff]
      %v306 = vld [vmem:[#allocation14 + $0x40] sm:$0xff]
      %v307 = vld [vmem:[#allocation14 + $0x48] sm:$0xff]
      %v308 = vld [vmem:[#allocation14 + $0x50] sm:$0xff]
      %v309 = vld [vmem:[#allocation14 + $0x58] sm:$0xff]
      %v310 = vld [vmem:[#allocation14 + $0x60] sm:$0xff]
      %v311 = vld [vmem:[#allocation14 + $0x68] sm:$0xff]
      %v312 = vld [vmem:[#allocation14 + $0x70] sm:$0xff]
      %v313 = vld [vmem:[#allocation14 + $0x78] sm:$0xff]
      %v314 = vld [vmem:[%s8] sm:$0x1]
      %v316 = vlaneseq
      %v317 = vshrl.u32 %v316, 7
      %v318 = vsub.s32 0, %v317
      %v319 = vrot.slane %v314, %v318
      %321 = vmatprep.subr.mxu0 0.0
      %322 = vmatpush1.msra.mxu0 %v298
      %323 = vmatprep.subr.mxu0 0.0
      %324 = vmatpush1.msra.mxu0 %v299
      %325 = vmatprep.subr.mxu0 0.0
      %326 = vmatpush1.msra.mxu0 %v300
      %327 = vmatprep.subr.mxu0 0.0
      %328 = vmatpush1.msra.mxu0 %v301
      %329 = vmatprep.subr.mxu0 0.0
      %330 = vmatpush1.msra.mxu0 %v302
      %331 = vmatprep.subr.mxu0 0.0
      %332 = vmatpush1.msra.mxu0 %v303
      %333 = vmatprep.subr.mxu0 0.0
      %334 = vmatpush1.msra.mxu0 %v304
      %335 = vmatprep.subr.mxu0 0.0
      %336 = vmatpush1.msra.mxu0 %v305
      %337 = vmatprep.subr.mxu0 0.0
      %338 = vmatpush1.msra.mxu0 %v306
      %339 = vmatprep.subr.mxu0 0.0
      %340 = vmatpush1.msra.mxu0 %v307
      %341 = vmatprep.subr.mxu0 0.0
      %342 = vmatpush1.msra.mxu0 %v308
      %343 = vmatprep.subr.mxu0 0.0
      %344 = vmatpush1.msra.mxu0 %v309
      %345 = vmatprep.subr.mxu0 0.0
      %346 = vmatpush1.msra.mxu0 %v310
      %347 = vmatprep.subr.mxu0 0.0
      %348 = vmatpush1.msra.mxu0 %v311
      %349 = vmatprep.subr.mxu0 0.0
      %350 = vmatpush1.msra.mxu0 %v312
      %351 = vmatprep.subr.mxu0 0.0
      %352 = vmatpush1.msra.mxu0 %v313
      %353 = vmatprep.subr.mxu0 0.0
      %354 = vmatpush1.msra.mxu0 0.0
      %355 = vmatprep.subr.mxu0 0.0
      %356 = vmatpush1.msra.mxu0 0.0
      %357 = vmatprep.subr.mxu0 0.0
      %358 = vmatpush1.msra.mxu0 0.0
      %359 = vmatprep.subr.mxu0 0.0
      %360 = vmatpush1.msra.mxu0 0.0
      %361 = vmatprep.subr.mxu0 0.0
      %362 = vmatpush1.msra.mxu0 0.0
      %363 = vmatprep.subr.mxu0 0.0
      %364 = vmatpush1.msra.mxu0 0.0
      %365 = vmatprep.subr.mxu0 0.0
      %366 = vmatpush1.msra.mxu0 0.0
      %367 = vmatprep.subr.mxu0 0.0
      %368 = vmatpush1.msra.mxu0 0.0
      %369 = vmatprep.subr.mxu0 0.0
      %370 = vmatpush1.msra.mxu0 0.0
      %371 = vmatprep.subr.mxu0 0.0
      %372 = vmatpush1.msra.mxu0 0.0
      %373 = vmatprep.subr.mxu0 0.0
      %374 = vmatpush1.msra.mxu0 0.0
      %375 = vmatprep.subr.mxu0 0.0
      %376 = vmatpush1.msra.mxu0 0.0
      %377 = vmatprep.subr.mxu0 0.0
      %378 = vmatpush1.msra.mxu0 0.0
      %379 = vmatprep.subr.mxu0 0.0
      %380 = vmatpush1.msra.mxu0 0.0
      %381 = vmatprep.subr.mxu0 0.0
      %382 = vmatpush1.msra.mxu0 0.0
      %383 = vmatprep.subr.mxu0 0.0
      %384 = vmatpush1.msra.mxu0 0.0
      %385 = vmatprep.mubr.f32.mxu0 0.0
      %386 = vmatmul.mubr.f32.gmra.mrb[0].mxu0 %v296
      %v387 = vpop.f32.mrb[0].mxu0
      %v388 = vadd.f32 %v319, %v387
      %v389 = vpop.f32.mrb[0].mxu0
      %390 = vmatprep.mubr.f32.mxu0 0.0
      %391 = vmatmul.mubr.f32.gmra.mrb[0].mxu0 %v297
      %v392 = vpop.f32.mrb[0].mxu0
      %v393 = vadd.f32 %v319, %v392
      %v394 = vpop.f32.mrb[0].mxu0
      %395 = vdwg.mxu0
      %vm396 = vcmp.ge.f32.partialorder %v388, 0.0
      %vm397 = vcmp.ge.f32.partialorder %v393, 0.0
      %v398 = vmul.f32 %v388, 0.1
      %v399 = vmul.f32 %v393, 0.1
      %v400 = vsel %vm396, %v388, %v398
      %v401 = vsel %vm397, %v393, %v399
      %402 = vst [vmem:[#allocation3] sm:$0xff] %v400
      %403 = vst [vmem:[#allocation3 + $0x8] sm:$0xff] %v401
      %v404 = vld [vmem:[#allocation10] sm:$0xff]
      %v405 = vld [vmem:[#allocation10 + $0x8] sm:$0xff]
      %v406 = vld [vmem:[#allocation16] sm:$0xff]
      %v407 = vld [vmem:[#allocation16 + $0x8] sm:$0xff]
      %v408 = vld [vmem:[#allocation16 + $0x10] sm:$0xff]
      %v409 = vld [vmem:[#allocation16 + $0x18] sm:$0xff]
      %v410 = vld [vmem:[#allocation16 + $0x20] sm:$0xff]
      %v411 = vld [vmem:[#allocation16 + $0x28] sm:$0xff]
      %v412 = vld [vmem:[#allocation16 + $0x30] sm:$0xff]
      %v413 = vld [vmem:[#allocation16 + $0x38] sm:$0xff]
      %v414 = vld [vmem:[#allocation16 + $0x40] sm:$0xff]
      %v415 = vld [vmem:[#allocation16 + $0x48] sm:$0xff]
      %v416 = vld [vmem:[#allocation16 + $0x50] sm:$0xff]
      %v417 = vld [vmem:[#allocation16 + $0x58] sm:$0xff]
      %v418 = vld [vmem:[#allocation16 + $0x60] sm:$0xff]
      %v419 = vld [vmem:[#allocation16 + $0x68] sm:$0xff]
      %v420 = vld [vmem:[#allocation16 + $0x70] sm:$0xff]
      %v421 = vld [vmem:[#allocation16 + $0x78] sm:$0xff]
      %v422 = vld [vmem:[%s9] sm:$0x1]
      %v424 = vlaneseq
      %v425 = vshrl.u32 %v424, 7
      %v426 = vsub.s32 0, %v425
      %v427 = vrot.slane %v422, %v426
      %429 = vmatprep.subr.mxu0 0.0
      %430 = vmatpush1.msra.mxu0 %v406
      %431 = vmatprep.subr.mxu0 0.0
      %432 = vmatpush1.msra.mxu0 %v407
      %433 = vmatprep.subr.mxu0 0.0
      %434 = vmatpush1.msra.mxu0 %v408
      %435 = vmatprep.subr.mxu0 0.0
      %436 = vmatpush1.msra.mxu0 %v409
      %437 = vmatprep.subr.mxu0 0.0
      %438 = vmatpush1.msra.mxu0 %v410
      %439 = vmatprep.subr.mxu0 0.0
      %440 = vmatpush1.msra.mxu0 %v411
      %441 = vmatprep.subr.mxu0 0.0
      %442 = vmatpush1.msra.mxu0 %v412
      %443 = vmatprep.subr.mxu0 0.0
      %444 = vmatpush1.msra.mxu0 %v413
      %445 = vmatprep.subr.mxu0 0.0
      %446 = vmatpush1.msra.mxu0 %v414
      %447 = vmatprep.subr.mxu0 0.0
      %448 = vmatpush1.msra.mxu0 %v415
      %449 = vmatprep.subr.mxu0 0.0
      %450 = vmatpush1.msra.mxu0 %v416
      %451 = vmatprep.subr.mxu0 0.0
      %452 = vmatpush1.msra.mxu0 %v417
      %453 = vmatprep.subr.mxu0 0.0
      %454 = vmatpush1.msra.mxu0 %v418
      %455 = vmatprep.subr.mxu0 0.0
      %456 = vmatpush1.msra.mxu0 %v419
      %457 = vmatprep.subr.mxu0 0.0
      %458 = vmatpush1.msra.mxu0 %v420
      %459 = vmatprep.subr.mxu0 0.0
      %460 = vmatpush1.msra.mxu0 %v421
      %461 = vmatprep.subr.mxu0 0.0
      %462 = vmatpush1.msra.mxu0 0.0
      %463 = vmatprep.subr.mxu0 0.0
      %464 = vmatpush1.msra.mxu0 0.0
      %465 = vmatprep.subr.mxu0 0.0
      %466 = vmatpush1.msra.mxu0 0.0
      %467 = vmatprep.subr.mxu0 0.0
      %468 = vmatpush1.msra.mxu0 0.0
      %469 = vmatprep.subr.mxu0 0.0
      %470 = vmatpush1.msra.mxu0 0.0
      %471 = vmatprep.subr.mxu0 0.0
      %472 = vmatpush1.msra.mxu0 0.0
      %473 = vmatprep.subr.mxu0 0.0
      %474 = vmatpush1.msra.mxu0 0.0
      %475 = vmatprep.subr.mxu0 0.0
      %476 = vmatpush1.msra.mxu0 0.0
      %477 = vmatprep.subr.mxu0 0.0
      %478 = vmatpush1.msra.mxu0 0.0
      %479 = vmatprep.subr.mxu0 0.0
      %480 = vmatpush1.msra.mxu0 0.0
      %481 = vmatprep.subr.mxu0 0.0
      %482 = vmatpush1.msra.mxu0 0.0
      %483 = vmatprep.subr.mxu0 0.0
      %484 = vmatpush1.msra.mxu0 0.0
      %485 = vmatprep.subr.mxu0 0.0
      %486 = vmatpush1.msra.mxu0 0.0
      %487 = vmatprep.subr.mxu0 0.0
      %488 = vmatpush1.msra.mxu0 0.0
      %489 = vmatprep.subr.mxu0 0.0
      %490 = vmatpush1.msra.mxu0 0.0
      %491 = vmatprep.subr.mxu0 0.0
      %492 = vmatpush1.msra.mxu0 0.0
      %493 = vmatprep.mubr.f32.mxu0 0.0
      %494 = vmatmul.mubr.f32.gmra.mrb[0].mxu0 %v404
      %v495 = vpop.f32.mrb[0].mxu0
      %v496 = vadd.f32 %v427, %v495
      %v497 = vpop.f32.mrb[0].mxu0
      %498 = vmatprep.mubr.f32.mxu0 0.0
      %499 = vmatmul.mubr.f32.gmra.mrb[0].mxu0 %v405
      %v500 = vpop.f32.mrb[0].mxu0
      %v501 = vadd.f32 %v427, %v500
      %v502 = vpop.f32.mrb[0].mxu0
      %503 = vdwg.mxu0
      %vm504 = vcmp.ge.f32.partialorder %v496, 0.0
      %vm505 = vcmp.ge.f32.partialorder %v501, 0.0
      %v506 = vmul.f32 %v496, 0.1
      %v507 = vmul.f32 %v501, 0.1
      %v508 = vsel %vm504, %v496, %v506
      %v509 = vsel %vm505, %v501, %v507
      %510 = vst [vmem:[#allocation4] sm:$0xff] %v508
      %511 = vst [vmem:[#allocation4 + $0x8] sm:$0xff] %v509
    $region101: #{tpu_custom_call.1} parent=1 // pred_fallthru
      _
    %v512 = vld [vmem:[#allocation2] sm:$0xff]
    %v513 = vld [vmem:[#allocation2 + $0x8] sm:$0xff]
    %v514 = vld [vmem:[#allocation17] sm:$0xff]
    %v515 = vld [vmem:[#allocation17 + $0x8] sm:$0xff]
    %v516 = vld [vmem:[#allocation17 + $0x10] sm:$0xff]
    %v517 = vld [vmem:[#allocation17 + $0x18] sm:$0xff]
    %v518 = vld [vmem:[#allocation17 + $0x20] sm:$0xff]
    %v519 = vld [vmem:[#allocation17 + $0x28] sm:$0xff]
    %v520 = vld [vmem:[#allocation17 + $0x30] sm:$0xff]
    %v521 = vld [vmem:[#allocation17 + $0x38] sm:$0xff]
    %v522 = vld [vmem:[#allocation17 + $0x40] sm:$0xff]
    %v523 = vld [vmem:[#allocation17 + $0x48] sm:$0xff]
    %v524 = vld [vmem:[#allocation17 + $0x50] sm:$0xff]
    %v525 = vld [vmem:[#allocation17 + $0x58] sm:$0xff]
    %v526 = vld [vmem:[#allocation17 + $0x60] sm:$0xff]
    %v527 = vld [vmem:[#allocation17 + $0x68] sm:$0xff]
    %v528 = vld [vmem:[#allocation17 + $0x70] sm:$0xff]
    %v529 = vld [vmem:[#allocation17 + $0x78] sm:$0xff]
    %v530 = vld [vmem:[#allocation3] sm:$0xff]
    %v531 = vld [vmem:[#allocation3 + $0x8] sm:$0xff]
    %v532 = vld [vmem:[#allocation19] sm:$0xff]
    %v533 = vld [vmem:[#allocation19 + $0x8] sm:$0xff]
    %v534 = vld [vmem:[#allocation19 + $0x10] sm:$0xff]
    %v535 = vld [vmem:[#allocation19 + $0x18] sm:$0xff]
    %v536 = vld [vmem:[#allocation19 + $0x20] sm:$0xff]
    %v537 = vld [vmem:[#allocation19 + $0x28] sm:$0xff]
    %v538 = vld [vmem:[#allocation19 + $0x30] sm:$0xff]
    %v539 = vld [vmem:[#allocation19 + $0x38] sm:$0xff]
    %v540 = vld [vmem:[#allocation19 + $0x40] sm:$0xff]
    %v541 = vld [vmem:[#allocation19 + $0x48] sm:$0xff]
    %v542 = vld [vmem:[#allocation19 + $0x50] sm:$0xff]
    %v543 = vld [vmem:[#allocation19 + $0x58] sm:$0xff]
    %v544 = vld [vmem:[#allocation19 + $0x60] sm:$0xff]
    %v545 = vld [vmem:[#allocation19 + $0x68] sm:$0xff]
    %v546 = vld [vmem:[#allocation19 + $0x70] sm:$0xff]
    %v547 = vld [vmem:[#allocation19 + $0x78] sm:$0xff]
    %548 = vmatprep.subr.mxu0 0.0
    %549 = vmatpush1.msra.mxu0 %v532
    %550 = vmatprep.subr.mxu0 0.0
    %551 = vmatpush1.msra.mxu0 %v533
    %552 = vmatprep.subr.mxu0 0.0
    %553 = vmatpush1.msra.mxu0 %v534
    %554 = vmatprep.subr.mxu0 0.0
    %555 = vmatpush1.msra.mxu0 %v535
    %556 = vmatprep.subr.mxu0 0.0
    %557 = vmatpush1.msra.mxu0 %v536
    %558 = vmatprep.subr.mxu0 0.0
    %559 = vmatpush1.msra.mxu0 %v537
    %560 = vmatprep.subr.mxu0 0.0
    %561 = vmatpush1.msra.mxu0 %v538
    %562 = vmatprep.subr.mxu0 0.0
    %563 = vmatpush1.msra.mxu0 %v539
    %564 = vmatprep.subr.mxu0 0.0
    %565 = vmatpush1.msra.mxu0 %v540
    %566 = vmatprep.subr.mxu0 0.0
    %567 = vmatpush1.msra.mxu0 %v541
    %568 = vmatprep.subr.mxu0 0.0
    %569 = vmatpush1.msra.mxu0 %v542
    %570 = vmatprep.subr.mxu0 0.0
    %571 = vmatpush1.msra.mxu0 %v543
    %572 = vmatprep.subr.mxu0 0.0
    %573 = vmatpush1.msra.mxu0 %v544
    %574 = vmatprep.subr.mxu0 0.0
    %575 = vmatpush1.msra.mxu0 %v545
    %576 = vmatprep.subr.mxu0 0.0
    %577 = vmatpush1.msra.mxu0 %v546
    %578 = vmatprep.subr.mxu0 0.0
    %579 = vmatpush1.msra.mxu0 %v547
    %580 = vmatprep.subr.mxu0 0.0
    %581 = vmatpush1.msra.mxu0 0.0
    %582 = vmatprep.subr.mxu0 0.0
    %583 = vmatpush1.msra.mxu0 0.0
    %584 = vmatprep.subr.mxu0 0.0
    %585 = vmatpush1.msra.mxu0 0.0
    %586 = vmatprep.subr.mxu0 0.0
    %587 = vmatpush1.msra.mxu0 0.0
    %588 = vmatprep.subr.mxu0 0.0
    %589 = vmatpush1.msra.mxu0 0.0
    %590 = vmatprep.subr.mxu0 0.0
    %591 = vmatpush1.msra.mxu0 0.0
    %592 = vmatprep.subr.mxu0 0.0
    %593 = vmatpush1.msra.mxu0 0.0
    %594 = vmatprep.subr.mxu0 0.0
    %595 = vmatpush1.msra.mxu0 0.0
    %596 = vmatprep.subr.mxu0 0.0
    %597 = vmatpush1.msra.mxu0 0.0
    %598 = vmatprep.subr.mxu0 0.0
    %599 = vmatpush1.msra.mxu0 0.0
    %600 = vmatprep.subr.mxu0 0.0
    %601 = vmatpush1.msra.mxu0 0.0
    %602 = vmatprep.subr.mxu0 0.0
    %603 = vmatpush1.msra.mxu0 0.0
    %604 = vmatprep.subr.mxu0 0.0
    %605 = vmatpush1.msra.mxu0 0.0
    %606 = vmatprep.subr.mxu0 0.0
    %607 = vmatpush1.msra.mxu0 0.0
    %608 = vmatprep.subr.mxu0 0.0
    %609 = vmatpush1.msra.mxu0 0.0
    %610 = vmatprep.subr.mxu0 0.0
    %611 = vmatpush1.msra.mxu0 0.0
    %612 = vmatprep.mubr.f32.mxu0 0.0
    %613 = vmatmul.mubr.f32.gmra.mrb[0].mxu0 %v530
    %v614 = vpop.f32.mrb[0].mxu0
    %v615 = vadd.f32 0.0, %v614
    %v616 = vpop.f32.mrb[0].mxu0
    %617 = vmatprep.mubr.f32.mxu0 0.0
    %618 = vmatmul.mubr.f32.gmra.mrb[0].mxu0 %v531
    %v619 = vpop.f32.mrb[0].mxu0
    %v620 = vadd.f32 0.0, %v619
    %v621 = vpop.f32.mrb[0].mxu0
    %622 = vdwg.mxu0
    %623 = vmatprep.subr.mxu0 0.0
    %624 = vmatpush1.msra.mxu0 %v514
    %625 = vmatprep.subr.mxu0 0.0
    %626 = vmatpush1.msra.mxu0 %v515
    %627 = vmatprep.subr.mxu0 0.0
    %628 = vmatpush1.msra.mxu0 %v516
    %629 = vmatprep.subr.mxu0 0.0
    %630 = vmatpush1.msra.mxu0 %v517
    %631 = vmatprep.subr.mxu0 0.0
    %632 = vmatpush1.msra.mxu0 %v518
    %633 = vmatprep.subr.mxu0 0.0
    %634 = vmatpush1.msra.mxu0 %v519
    %635 = vmatprep.subr.mxu0 0.0
    %636 = vmatpush1.msra.mxu0 %v520
    %637 = vmatprep.subr.mxu0 0.0
    %638 = vmatpush1.msra.mxu0 %v521
    %639 = vmatprep.subr.mxu0 0.0
    %640 = vmatpush1.msra.mxu0 %v522
    %641 = vmatprep.subr.mxu0 0.0
    %642 = vmatpush1.msra.mxu0 %v523
    %643 = vmatprep.subr.mxu0 0.0
    %644 = vmatpush1.msra.mxu0 %v524
    %645 = vmatprep.subr.mxu0 0.0
    %646 = vmatpush1.msra.mxu0 %v525
    %647 = vmatprep.subr.mxu0 0.0
    %648 = vmatpush1.msra.mxu0 %v526
    %649 = vmatprep.subr.mxu0 0.0
    %650 = vmatpush1.msra.mxu0 %v527
    %651 = vmatprep.subr.mxu0 0.0
    %652 = vmatpush1.msra.mxu0 %v528
    %653 = vmatprep.subr.mxu0 0.0
    %654 = vmatpush1.msra.mxu0 %v529
    %655 = vmatprep.subr.mxu0 0.0
    %656 = vmatpush1.msra.mxu0 0.0
    %657 = vmatprep.subr.mxu0 0.0
    %658 = vmatpush1.msra.mxu0 0.0
    %659 = vmatprep.subr.mxu0 0.0
    %660 = vmatpush1.msra.mxu0 0.0
    %661 = vmatprep.subr.mxu0 0.0
    %662 = vmatpush1.msra.mxu0 0.0
    %663 = vmatprep.subr.mxu0 0.0
    %664 = vmatpush1.msra.mxu0 0.0
    %665 = vmatprep.subr.mxu0 0.0
    %666 = vmatpush1.msra.mxu0 0.0
    %667 = vmatprep.subr.mxu0 0.0
    %668 = vmatpush1.msra.mxu0 0.0
    %669 = vmatprep.subr.mxu0 0.0
    %670 = vmatpush1.msra.mxu0 0.0
    %671 = vmatprep.subr.mxu0 0.0
    %672 = vmatpush1.msra.mxu0 0.0
    %673 = vmatprep.subr.mxu0 0.0
    %674 = vmatpush1.msra.mxu0 0.0
    %675 = vmatprep.subr.mxu0 0.0
    %676 = vmatpush1.msra.mxu0 0.0
    %677 = vmatprep.subr.mxu0 0.0
    %678 = vmatpush1.msra.mxu0 0.0
    %679 = vmatprep.subr.mxu0 0.0
    %680 = vmatpush1.msra.mxu0 0.0
    %681 = vmatprep.subr.mxu0 0.0
    %682 = vmatpush1.msra.mxu0 0.0
    %683 = vmatprep.subr.mxu0 0.0
    %684 = vmatpush1.msra.mxu0 0.0
    %685 = vmatprep.subr.mxu0 0.0
    %686 = vmatpush1.msra.mxu0 0.0
    %687 = vmatprep.mubr.f32.mxu0 0.0
    %688 = vmatmul.mubr.f32.gmra.mrb[0].mxu0 %v512
    %v689 = vpop.f32.mrb[0].mxu0
    %v690 = vadd.f32 %v615, %v689
    %v691 = vpop.f32.mrb[0].mxu0
    %692 = vmatprep.mubr.f32.mxu0 0.0
    %693 = vmatmul.mubr.f32.gmra.mrb[0].mxu0 %v513
    %v694 = vpop.f32.mrb[0].mxu0
    %v695 = vadd.f32 %v620, %v694
    %v696 = vpop.f32.mrb[0].mxu0
    %697 = vdwg.mxu0
    %v698 = vld [vmem:[#allocation4] sm:$0xff]
    %v699 = vld [vmem:[#allocation4 + $0x8] sm:$0xff]
    %v700 = vld [vmem:[#allocation20] sm:$0xff]
    %v701 = vld [vmem:[#allocation20 + $0x8] sm:$0xff]
    %v702 = vld [vmem:[#allocation20 + $0x10] sm:$0xff]
    %v703 = vld [vmem:[#allocation20 + $0x18] sm:$0xff]
    %v704 = vld [vmem:[#allocation20 + $0x20] sm:$0xff]
    %v705 = vld [vmem:[#allocation20 + $0x28] sm:$0xff]
    %v706 = vld [vmem:[#allocation20 + $0x30] sm:$0xff]
    %v707 = vld [vmem:[#allocation20 + $0x38] sm:$0xff]
    %v708 = vld [vmem:[#allocation20 + $0x40] sm:$0xff]
    %v709 = vld [vmem:[#allocation20 + $0x48] sm:$0xff]
    %v710 = vld [vmem:[#allocation20 + $0x50] sm:$0xff]
    %v711 = vld [vmem:[#allocation20 + $0x58] sm:$0xff]
    %v712 = vld [vmem:[#allocation20 + $0x60] sm:$0xff]
    %v713 = vld [vmem:[#allocation20 + $0x68] sm:$0xff]
    %v714 = vld [vmem:[#allocation20 + $0x70] sm:$0xff]
    %v715 = vld [vmem:[#allocation20 + $0x78] sm:$0xff]
    %716 = vmatprep.subr.mxu0 0.0
    %717 = vmatpush1.msra.mxu0 %v700
    %718 = vmatprep.subr.mxu0 0.0
    %719 = vmatpush1.msra.mxu0 %v701
    %720 = vmatprep.subr.mxu0 0.0
    %721 = vmatpush1.msra.mxu0 %v702
    %722 = vmatprep.subr.mxu0 0.0
    %723 = vmatpush1.msra.mxu0 %v703
    %724 = vmatprep.subr.mxu0 0.0
    %725 = vmatpush1.msra.mxu0 %v704
    %726 = vmatprep.subr.mxu0 0.0
    %727 = vmatpush1.msra.mxu0 %v705
    %728 = vmatprep.subr.mxu0 0.0
    %729 = vmatpush1.msra.mxu0 %v706
    %730 = vmatprep.subr.mxu0 0.0
    %731 = vmatpush1.msra.mxu0 %v707
    %732 = vmatprep.subr.mxu0 0.0
    %733 = vmatpush1.msra.mxu0 %v708
    %734 = vmatprep.subr.mxu0 0.0
    %735 = vmatpush1.msra.mxu0 %v709
    %736 = vmatprep.subr.mxu0 0.0
    %737 = vmatpush1.msra.mxu0 %v710
    %738 = vmatprep.subr.mxu0 0.0
    %739 = vmatpush1.msra.mxu0 %v711
    %740 = vmatprep.subr.mxu0 0.0
    %741 = vmatpush1.msra.mxu0 %v712
    %742 = vmatprep.subr.mxu0 0.0
    %743 = vmatpush1.msra.mxu0 %v713
    %744 = vmatprep.subr.mxu0 0.0
    %745 = vmatpush1.msra.mxu0 %v714
    %746 = vmatprep.subr.mxu0 0.0
    %747 = vmatpush1.msra.mxu0 %v715
    %748 = vmatprep.subr.mxu0 0.0
    %749 = vmatpush1.msra.mxu0 0.0
    %750 = vmatprep.subr.mxu0 0.0
    %751 = vmatpush1.msra.mxu0 0.0
    %752 = vmatprep.subr.mxu0 0.0
    %753 = vmatpush1.msra.mxu0 0.0
    %754 = vmatprep.subr.mxu0 0.0
    %755 = vmatpush1.msra.mxu0 0.0
    %756 = vmatprep.subr.mxu0 0.0
    %757 = vmatpush1.msra.mxu0 0.0
    %758 = vmatprep.subr.mxu0 0.0
    %759 = vmatpush1.msra.mxu0 0.0
    %760 = vmatprep.subr.mxu0 0.0
    %761 = vmatpush1.msra.mxu0 0.0
    %762 = vmatprep.subr.mxu0 0.0
    %763 = vmatpush1.msra.mxu0 0.0
    %764 = vmatprep.subr.mxu0 0.0
    %765 = vmatpush1.msra.mxu0 0.0
    %766 = vmatprep.subr.mxu0 0.0
    %767 = vmatpush1.msra.mxu0 0.0
    %768 = vmatprep.subr.mxu0 0.0
    %769 = vmatpush1.msra.mxu0 0.0
    %770 = vmatprep.subr.mxu0 0.0
    %771 = vmatpush1.msra.mxu0 0.0
    %772 = vmatprep.subr.mxu0 0.0
    %773 = vmatpush1.msra.mxu0 0.0
    %774 = vmatprep.subr.mxu0 0.0
    %775 = vmatpush1.msra.mxu0 0.0
    %776 = vmatprep.subr.mxu0 0.0
    %777 = vmatpush1.msra.mxu0 0.0
    %778 = vmatprep.subr.mxu0 0.0
    %779 = vmatpush1.msra.mxu0 0.0
    %780 = vmatprep.mubr.f32.mxu0 0.0
    %781 = vmatmul.mubr.f32.gmra.mrb[0].mxu0 %v698
    %v782 = vpop.f32.mrb[0].mxu0
    %v783 = vadd.f32 0.0, %v782
    %v784 = vpop.f32.mrb[0].mxu0
    %785 = vmatprep.mubr.f32.mxu0 0.0
    %786 = vmatmul.mubr.f32.gmra.mrb[0].mxu0 %v699
    %v787 = vpop.f32.mrb[0].mxu0
    %v788 = vadd.f32 0.0, %v787
    %v789 = vpop.f32.mrb[0].mxu0
    %790 = vdwg.mxu0
    %v791 = vadd.f32 %v690, %v783
    %v792 = vadd.f32 %v695, %v788
    %v793 = vld [vmem:[%s13] sm:$0x1]
    %v795 = vlaneseq
    %v796 = vshrl.u32 %v795, 7
    %v797 = vsub.s32 0, %v796
    %v798 = vrot.slane %v793, %v797
    %v800 = vadd.f32 %v791, %v798
    %v801 = vadd.f32 %v792, %v798
    %v802 = vld [vmem:[#allocation11] sm:$0xff]
    %v803 = vld [vmem:[#allocation11 + $0x8] sm:$0xff]
    %v804 = vadd.f32 %v800, %v802
    %v805 = vadd.f32 %v801, %v803
    %806 = vst [vmem:[#allocation22] sm:$0xff] %v804
    %807 = vst [vmem:[#allocation22 + $0x8] sm:$0xff] %v805
    // Predicated region
    $region102: #{tpu_custom_call.1} parent=1 // pred_check
      _
    $region103: #{tpu_custom_call.1} parent=1 // pred_check_branch
      %809 = sbr.rel (0) target = $region105
    $region104: #{tpu_custom_call.1} parent=1 // pred_region
      %s811 = ssub.s32 256, 256
      %812 = vsyncadd [#allocation7], %s811
      %s813 = sshll.u32 [#allocation22], 4
      %s814 = int_to_ptr.vmem [resolvable:$true] %s813
      %819 = dma.vmem_to_hbm [thread:$0]  %s814, 256, %s14, [#allocation7], 128, 128, 8
    $region105: #{tpu_custom_call.1} parent=1 // pred_fallthru
      _
    // Predicated region
    $region106: #{tpu_custom_call.1} parent=1 // pred_check
      _
    $region107: #{tpu_custom_call.1} parent=1 // pred_check_branch
      %821 = sbr.rel (0) target = $region109
    $region108: #{tpu_custom_call.1} parent=1 // pred_region
      %822 = dma.done [#allocation7], 256
    $region109: #{tpu_custom_call.1} parent=1 // pred_fallthru
      _
    %823 = vsyncpa [#allocation6], 1
    %824 = vsyncpa [#allocation9], 1
    %825 = vsyncpa [#allocation12], 1
    %826 = vsyncpa [#allocation15], 1
    %827 = vsyncpa [#allocation18], 1
    %828 = vsyncpa [#allocation21], 1
    %829 = vsyncpa [#allocation7], 1

// kernel: tpu_custom_call.1
$region0: #{tpu_custom_call.1}
  #allocation0 [shape = 'u32[]', space=smem, size = 0x4, offset = 0x4, fixed_abs, tag = 'smem constant byte address 0x4 - core index']
  #allocation1 [shape = 'u32[144,128]{1,0:T(1,128)}', space=vmem, size = 0x12000, scoped, tag = 'internal scratch']
  #allocation2 [shape = 'f32[16,128]{1,0:T(8,128)}', space=vmem, size = 0x2000, scoped, tag = 'scratch operand']
  #allocation3 [shape = 'f32[16,128]{1,0:T(8,128)}', space=vmem, size = 0x2000, scoped, tag = 'scratch operand']
  #allocation4 [shape = 'f32[16,128]{1,0:T(8,128)}', space=vmem, size = 0x2000, scoped, tag = 'scratch operand']
  %s0 = inlined_call_operand.hbm [shape: f32[16,128], index: 0, kind: input, shape index: {}]
  %s1 = inlined_call_operand.hbm [shape: f32[16,128], index: 1, kind: input, shape index: {}]
  %s2 = inlined_call_operand.hbm [shape: f32[16,128], index: 2, kind: input, shape index: {}]
  %s3 = inlined_call_operand.hbm [shape: f32[16,128], index: 3, kind: input, shape index: {}]
  %s4 = inlined_call_operand.hbm [shape: f32[128,128], index: 4, kind: input, shape index: {}]
  %s5 = inlined_call_operand.hbm [shape: f32[128,128], index: 5, kind: input, shape index: {}]
  %s6 = inlined_call_operand.hbm [shape: f32[128,128], index: 6, kind: input, shape index: {}]
  %s7 = inlined_call_operand.vmem [shape: f32[1,128], index: 7, kind: input, shape index: {}]
  %s8 = inlined_call_operand.vmem [shape: f32[1,128], index: 8, kind: input, shape index: {}]
  %s9 = inlined_call_operand.vmem [shape: f32[1,128], index: 9, kind: input, shape index: {}]
  %s10 = inlined_call_operand.hbm [shape: f32[128,128], index: 10, kind: input, shape index: {}]
  %s11 = inlined_call_operand.hbm [shape: f32[128,128], index: 11, kind: input, shape index: {}]
  %s12 = inlined_call_operand.hbm [shape: f32[128,128], index: 12, kind: input, shape index: {}]
  %s13 = inlined_call_operand.vmem [shape: f32[1,128], index: 13, kind: input, shape index: {}]
  %s14 = inlined_call_operand.hbm [shape: f32[16,128], index: 14, kind: output, shape index: {}]
  %s15 = sld [smem:[#allocation0]]
  $region110: #{tpu_custom_call.1} parent=0
    _
  %s17 = ssub.s32 1, %s15
  %s18 = scalar_select 0, %s17, %s15
  $region1: #{tpu_custom_call.1} parent=0
    #allocation5 [shape = 'u8[8192]{0}', space=vmem, size = 0x2000, scoped, tag = 'input window, operand 0, single buffered']
    #allocation6 [shape = 's32[1]{0}', space=sflag, size = 0x4, scoped, tag = 'scoped memory for tpu_custom_call.1']
    #allocation7 [shape = 's32[1]{0}', space=sflag, size = 0x4, scoped, tag = 'scoped memory for tpu_custom_call.1']
    #allocation8 [shape = 'u8[8192]{0}', space=vmem, size = 0x2000, scoped, tag = 'input window, operand 1, single buffered']
    #allocation9 [shape = 's32[1]{0}', space=sflag, size = 0x4, scoped, tag = 'scoped memory for tpu_custom_call.1']
    #allocation10 [shape = 'u8[8192]{0}', space=vmem, size = 0x2000, scoped, tag = 'input window, operand 2, single buffered']
    #allocation11 [shape = 'u8[8192]{0}', space=vmem, size = 0x2000, scoped, tag = 'input window, operand 3, single buffered']
    #allocation12 [shape = 's32[1]{0}', space=sflag, size = 0x4, scoped, tag = 'scoped memory for tpu_custom_call.1']
    #allocation13 [shape = 'u8[65536]{0}', space=vmem, size = 0x10000, scoped, tag = 'input window, operand 4, single buffered']
    #allocation14 [shape = 'u8[65536]{0}', space=vmem, size = 0x10000, scoped, tag = 'input window, operand 5, single buffered']
    #allocation15 [shape = 's32[1]{0}', space=sflag, size = 0x4, scoped, tag = 'scoped memory for tpu_custom_call.1']
    #allocation16 [shape = 'u8[65536]{0}', space=vmem, size = 0x10000, scoped, tag = 'input window, operand 6, single buffered']
    #allocation17 [shape = 'u8[65536]{0}', space=vmem, size = 0x10000, scoped, tag = 'input window, operand 10, single buffered']
    #allocation18 [shape = 's32[1]{0}', space=sflag, size = 0x4, scoped, tag = 'scoped memory for tpu_custom_call.1']
    #allocation19 [shape = 'u8[65536]{0}', space=vmem, size = 0x10000, scoped, tag = 'input window, operand 11, single buffered']
    #allocation20 [shape = 'u8[65536]{0}', space=vmem, size = 0x10000, scoped, tag = 'input window, operand 12, single buffered']
    #allocation21 [shape = 's32[1]{0}', space=sflag, size = 0x4, scoped, tag = 'scoped memory for tpu_custom_call.1']
    #allocation22 [shape = 'u8[8192]{0}', space=vmem, size = 0x2000, scoped, tag = 'output window, operand 0, single buffered']
    %19 = vsyncpa [#allocation6], 0
    %20 = vsyncpa [#allocation9], 0
    %21 = vsyncpa [#allocation12], 0
    %22 = vsyncpa [#allocation15], 0
    %23 = vsyncpa [#allocation18], 0
    %24 = vsyncpa [#allocation21], 0
    %25 = vsyncpa [#allocation7], 0
    // Predicated region
    $region2: #{tpu_custom_call.1} parent=1 // pred_check
      _
    $region3: #{tpu_custom_call.1} parent=1 // pred_check_branch
      %27 = sbr.rel (0) target = $region5
    $region4: #{tpu_custom_call.1} parent=1 // pred_region
      %s29 = ssub.s32 256, 256
      %30 = vsyncadd [#allocation6], %s29
      %s31 = sshll.u32 [#allocation5], 4
      %s32 = int_to_ptr.vmem [resolvable:$true] %s31
      %37 = dma.hbm_to_vmem [thread:$0]  %s0, 256, %s32, [#allocation6], 128, 128, 8
    $region5: #{tpu_custom_call.1} parent=1 // pred_fallthru
      _
    // Predicated region
    $region6: #{tpu_custom_call.1} parent=1 // pred_check
      _
    $region7: #{tpu_custom_call.1} parent=1 // pred_check_branch
      %39 = sbr.rel (0) target = $region9
    $region8: #{tpu_custom_call.1} parent=1 // pred_region
      %s41 = ssub.s32 256, 256
      %42 = vsyncadd [#allocation9], %s41
      %s43 = sshll.u32 [#allocation8], 4
      %s44 = int_to_ptr.vmem [resolvable:$true] %s43
      %49 = dma.hbm_to_vmem [thread:$0]  %s1, 256, %s44, [#allocation9], 128, 128, 8
    $region9: #{tpu_custom_call.1} parent=1 // pred_fallthru
      _
    // Predicated region
    $region10: #{tpu_custom_call.1} parent=1 // pred_check
      _
    $region11: #{tpu_custom_call.1} parent=1 // pred_check_branch
      %51 = sbr.rel (0) target = $region13
    $region12: #{tpu_custom_call.1} parent=1 // pred_region
      %s53 = ssub.s32 256, 256
      %54 = vsyncadd [#allocation9], %s53
      %s55 = sshll.u32 [#allocation10], 4
      %s56 = int_to_ptr.vmem [resolvable:$true] %s55
      %61 = dma.hbm_to_vmem [thread:$0]  %s2, 256, %s56, [#allocation9], 128, 128, 8
    $region13: #{tpu_custom_call.1} parent=1 // pred_fallthru
      _
    // Predicated region
    $region14: #{tpu_custom_call.1} parent=1 // pred_check
      _
    $region15: #{tpu_custom_call.1} parent=1 // pred_check_branch
      %63 = sbr.rel (0) target = $region17
    $region16: #{tpu_custom_call.1} parent=1 // pred_region
      %s65 = ssub.s32 256, 256
      %66 = vsyncadd [#allocation12], %s65
      %s67 = sshll.u32 [#allocation11], 4
      %s68 = int_to_ptr.vmem [resolvable:$true] %s67
      %73 = dma.hbm_to_vmem [thread:$0]  %s3, 256, %s68, [#allocation12], 128, 128, 8
    $region17: #{tpu_custom_call.1} parent=1 // pred_fallthru
      _
    // Predicated region
    $region18: #{tpu_custom_call.1} parent=1 // pred_check
      _
    $region19: #{tpu_custom_call.1} parent=1 // pred_check_branch
      %75 = sbr.rel (0) target = $region21
    $region20: #{tpu_custom_call.1} parent=1 // pred_region
      %s77 = ssub.s32 2048, 2048
      %78 = vsyncadd [#allocation12], %s77
      %s79 = sshll.u32 [#allocation13], 4
      %s80 = int_to_ptr.vmem [resolvable:$true] %s79
      %85 = dma.hbm_to_vmem [thread:$0]  %s4, 2048, %s80, [#allocation12], 128, 128, 8
    $region21: #{tpu_custom_call.1} parent=1 // pred_fallthru
      _
    // Predicated region
    $region22: #{tpu_custom_call.1} parent=1 // pred_check
      _
    $region23: #{tpu_custom_call.1} parent=1 // pred_check_branch
      %87 = sbr.rel (0) target = $region25
    $region24: #{tpu_custom_call.1} parent=1 // pred_region
      %s89 = ssub.s32 2048, 2048
      %90 = vsyncadd [#allocation15], %s89
      %s91 = sshll.u32 [#allocation14], 4
      %s92 = int_to_ptr.vmem [resolvable:$true] %s91
      %97 = dma.hbm_to_vmem [thread:$0]  %s5, 2048, %s92, [#allocation15], 128, 128, 8
    $region25: #{tpu_custom_call.1} parent=1 // pred_fallthru
      _
    // Predicated region
    $region26: #{tpu_custom_call.1} parent=1 // pred_check
      _
    $region27: #{tpu_custom_call.1} parent=1 // pred_check_branch
      %99 = sbr.rel (0) target = $region29
    $region28: #{tpu_custom_call.1} parent=1 // pred_region
      %s101 = ssub.s32 2048, 2048
      %102 = vsyncadd [#allocation15], %s101
      %s103 = sshll.u32 [#allocation16], 4
      %s104 = int_to_ptr.vmem [resolvable:$true] %s103
      %109 = dma.hbm_to_vmem [thread:$0]  %s6, 2048, %s104, [#allocation15], 128, 128, 8
    $region29: #{tpu_custom_call.1} parent=1 // pred_fallthru
      _
    // Predicated region
    $region30: #{tpu_custom_call.1} parent=1 // pred_check
      _
    $region31: #{tpu_custom_call.1} parent=1 // pred_check_branch
      %111 = sbr.rel (0) target = $region33
    $region32: #{tpu_custom_call.1} parent=1 // pred_region
      _
    $region33: #{tpu_custom_call.1} parent=1 // pred_fallthru
      _
    // Predicated region
    $region34: #{tpu_custom_call.1} parent=1 // pred_check
      _
    $region35: #{tpu_custom_call.1} parent=1 // pred_check_branch
      %113 = sbr.rel (0) target = $region37
    $region36: #{tpu_custom_call.1} parent=1 // pred_region
      _
    $region37: #{tpu_custom_call.1} parent=1 // pred_fallthru
      _
    // Predicated region
    $region38: #{tpu_custom_call.1} parent=1 // pred_check
      _
    $region39: #{tpu_custom_call.1} parent=1 // pred_check_branch
      %115 = sbr.rel (0) target = $region41
    $region40: #{tpu_custom_call.1} parent=1 // pred_region
      _
    $region41: #{tpu_custom_call.1} parent=1 // pred_fallthru
      _
    // Predicated region
    $region42: #{tpu_custom_call.1} parent=1 // pred_check
      _
    $region43: #{tpu_custom_call.1} parent=1 // pred_check_branch
      %117 = sbr.rel (0) target = $region45
    $region44: #{tpu_custom_call.1} parent=1 // pred_region
      %s119 = ssub.s32 2048, 2048
      %120 = vsyncadd [#allocation18], %s119
      %s121 = sshll.u32 [#allocation17], 4
      %s122 = int_to_ptr.vmem [resolvable:$true] %s121
      %127 = dma.hbm_to_vmem [thread:$0]  %s10, 2048, %s122, [#allocation18], 128, 128, 8
    $region45: #{tpu_custom_call.1} parent=1 // pred_fallthru
      _
    // Predicated region
    $region46: #{tpu_custom_call.1} parent=1 // pred_check
      _
    $region47: #{tpu_custom_call.1} parent=1 // pred_check_branch
      %129 = sbr.rel (0) target = $region49
    $region48: #{tpu_custom_call.1} parent=1 // pred_region
      %s131 = ssub.s32 2048, 2048
      %132 = vsyncadd [#allocation18], %s131
      %s133 = sshll.u32 [#allocation19], 4
      %s134 = int_to_ptr.vmem [resolvable:$true] %s133
      %139 = dma.hbm_to_vmem [thread:$0]  %s11, 2048, %s134, [#allocation18], 128, 128, 8
    $region49: #{tpu_custom_call.1} parent=1 // pred_fallthru
      _
    // Predicated region
    $region50: #{tpu_custom_call.1} parent=1 // pred_check
      _
    $region51: #{tpu_custom_call.1} parent=1 // pred_check_branch
      %141 = sbr.rel (0) target = $region53
    $region52: #{tpu_custom_call.1} parent=1 // pred_region
      %s143 = ssub.s32 2048, 2048
      %144 = vsyncadd [#allocation21], %s143
      %s145 = sshll.u32 [#allocation20], 4
      %s146 = int_to_ptr.vmem [resolvable:$true] %s145
      %151 = dma.hbm_to_vmem [thread:$0]  %s12, 2048, %s146, [#allocation21], 128, 128, 8
    $region53: #{tpu_custom_call.1} parent=1 // pred_fallthru
      _
    // Predicated region
    $region54: #{tpu_custom_call.1} parent=1 // pred_check
      _
    $region55: #{tpu_custom_call.1} parent=1 // pred_check_branch
      %153 = sbr.rel (0) target = $region57
    $region56: #{tpu_custom_call.1} parent=1 // pred_region
      _
    $region57: #{tpu_custom_call.1} parent=1 // pred_fallthru
      _
    // Predicated region
    $region58: #{tpu_custom_call.1} parent=1 // pred_check
      _
    $region59: #{tpu_custom_call.1} parent=1 // pred_check_branch
      %155 = sbr.rel (0) target = $region61
    $region60: #{tpu_custom_call.1} parent=1 // pred_region
      %156 = dma.done [#allocation6], 256
    $region61: #{tpu_custom_call.1} parent=1 // pred_fallthru
      _
    // Predicated region
    $region62: #{tpu_custom_call.1} parent=1 // pred_check
      _
    $region63: #{tpu_custom_call.1} parent=1 // pred_check_branch
      %158 = sbr.rel (0) target = $region65
    $region64: #{tpu_custom_call.1} parent=1 // pred_region
      %159 = dma.done [#allocation9], 256
    $region65: #{tpu_custom_call.1} parent=1 // pred_fallthru
      _
    // Predicated region
    $region66: #{tpu_custom_call.1} parent=1 // pred_check
      _
    $region67: #{tpu_custom_call.1} parent=1 // pred_check_branch
      %161 = sbr.rel (0) target = $region69
    $region68: #{tpu_custom_call.1} parent=1 // pred_region
      %162 = dma.done [#allocation9], 256
    $region69: #{tpu_custom_call.1} parent=1 // pred_fallthru
      _
    // Predicated region
    $region70: #{tpu_custom_call.1} parent=1 // pred_check
      _
    $region71: #{tpu_custom_call.1} parent=1 // pred_check_branch
      %164 = sbr.rel (0) target = $region73
    $region72: #{tpu_custom_call.1} parent=1 // pred_region
      %165 = dma.done [#allocation12], 256
    $region73: #{tpu_custom_call.1} parent=1 // pred_fallthru
      _
    // Predicated region
    $region74: #{tpu_custom_call.1} parent=1 // pred_check
      _
    $region75: #{tpu_custom_call.1} parent=1 // pred_check_branch
      %167 = sbr.rel (0) target = $region77
    $region76: #{tpu_custom_call.1} parent=1 // pred_region
      %168 = dma.done [#allocation12], 2048
    $region77: #{tpu_custom_call.1} parent=1 // pred_fallthru
      _
    // Predicated region
    $region78: #{tpu_custom_call.1} parent=1 // pred_check
      _
    $region79: #{tpu_custom_call.1} parent=1 // pred_check_branch
      %170 = sbr.rel (0) target = $region81
    $region80: #{tpu_custom_call.1} parent=1 // pred_region
      %171 = dma.done [#allocation15], 2048
    $region81: #{tpu_custom_call.1} parent=1 // pred_fallthru
      _
    // Predicated region
    $region82: #{tpu_custom_call.1} parent=1 // pred_check
      _
    $region83: #{tpu_custom_call.1} parent=1 // pred_check_branch
      %173 = sbr.rel (0) target = $region85
    $region84: #{tpu_custom_call.1} parent=1 // pred_region
      %174 = dma.done [#allocation15], 2048
    $region85: #{tpu_custom_call.1} parent=1 // pred_fallthru
      _
    // Predicated region
    $region86: #{tpu_custom_call.1} parent=1 // pred_check
      _
    $region87: #{tpu_custom_call.1} parent=1 // pred_check_branch
      %176 = sbr.rel (0) target = $region89
    $region88: #{tpu_custom_call.1} parent=1 // pred_region
      %177 = dma.done [#allocation18], 2048
    $region89: #{tpu_custom_call.1} parent=1 // pred_fallthru
      _
    // Predicated region
    $region90: #{tpu_custom_call.1} parent=1 // pred_check
      _
    $region91: #{tpu_custom_call.1} parent=1 // pred_check_branch
      %179 = sbr.rel (0) target = $region93
    $region92: #{tpu_custom_call.1} parent=1 // pred_region
      %180 = dma.done [#allocation18], 2048
    $region93: #{tpu_custom_call.1} parent=1 // pred_fallthru
      _
    // Predicated region
    $region94: #{tpu_custom_call.1} parent=1 // pred_check
      _
    $region95: #{tpu_custom_call.1} parent=1 // pred_check_branch
      %182 = sbr.rel (0) target = $region97
    $region96: #{tpu_custom_call.1} parent=1 // pred_region
      %183 = dma.done [#allocation21], 2048
    $region97: #{tpu_custom_call.1} parent=1 // pred_fallthru
      _
    %p184 = scmp.eq.s32.totalorder 0, 0
    // Predicated region
    $region98: #{tpu_custom_call.1} parent=1 // pred_check
      %p185 = pneg %p184
    $region99: #{tpu_custom_call.1} parent=1 // pred_check_branch
      %187 = sbr.rel (%p185) target = $region101
    $region100: #{tpu_custom_call.1} parent=1 // pred_region
      %v188 = vld [vmem:[#allocation5] sm:$0xff]
      %v189 = vld [vmem:[#allocation5 + $0x8] sm:$0xff]
      %v190 = vld [vmem:[#allocation13] sm:$0xff]
      %v191 = vld [vmem:[#allocation13 + $0x8] sm:$0xff]
      %v192 = vld [vmem:[#allocation13 + $0x10] sm:$0xff]
      %v193 = vld [vmem:[#allocation13 + $0x18] sm:$0xff]
      %v194 = vld [vmem:[#allocation13 + $0x20] sm:$0xff]
      %v195 = vld [vmem:[#allocation13 + $0x28] sm:$0xff]
      %v196 = vld [vmem:[#allocation13 + $0x30] sm:$0xff]
      %v197 = vld [vmem:[#allocation13 + $0x38] sm:$0xff]
      %v198 = vld [vmem:[#allocation13 + $0x40] sm:$0xff]
      %v199 = vld [vmem:[#allocation13 + $0x48] sm:$0xff]
      %v200 = vld [vmem:[#allocation13 + $0x50] sm:$0xff]
      %v201 = vld [vmem:[#allocation13 + $0x58] sm:$0xff]
      %v202 = vld [vmem:[#allocation13 + $0x60] sm:$0xff]
      %v203 = vld [vmem:[#allocation13 + $0x68] sm:$0xff]
      %v204 = vld [vmem:[#allocation13 + $0x70] sm:$0xff]
      %v205 = vld [vmem:[#allocation13 + $0x78] sm:$0xff]
      %v206 = vld [vmem:[%s7] sm:$0x1]
      %v208 = vlaneseq
      %v209 = vshrl.u32 %v208, 7
      %v210 = vsub.s32 0, %v209
      %v211 = vrot.slane %v206, %v210
      %213 = vmatprep.subr.mxu0 0.0
      %214 = vmatpush1.msra.mxu0 %v190
      %215 = vmatprep.subr.mxu0 0.0
      %216 = vmatpush1.msra.mxu0 %v191
      %217 = vmatprep.subr.mxu0 0.0
      %218 = vmatpush1.msra.mxu0 %v192
      %219 = vmatprep.subr.mxu0 0.0
      %220 = vmatpush1.msra.mxu0 %v193
      %221 = vmatprep.subr.mxu0 0.0
      %222 = vmatpush1.msra.mxu0 %v194
      %223 = vmatprep.subr.mxu0 0.0
      %224 = vmatpush1.msra.mxu0 %v195
      %225 = vmatprep.subr.mxu0 0.0
      %226 = vmatpush1.msra.mxu0 %v196
      %227 = vmatprep.subr.mxu0 0.0
      %228 = vmatpush1.msra.mxu0 %v197
      %229 = vmatprep.subr.mxu0 0.0
      %230 = vmatpush1.msra.mxu0 %v198
      %231 = vmatprep.subr.mxu0 0.0
      %232 = vmatpush1.msra.mxu0 %v199
      %233 = vmatprep.subr.mxu0 0.0
      %234 = vmatpush1.msra.mxu0 %v200
      %235 = vmatprep.subr.mxu0 0.0
      %236 = vmatpush1.msra.mxu0 %v201
      %237 = vmatprep.subr.mxu0 0.0
      %238 = vmatpush1.msra.mxu0 %v202
      %239 = vmatprep.subr.mxu0 0.0
      %240 = vmatpush1.msra.mxu0 %v203
      %241 = vmatprep.subr.mxu0 0.0
      %242 = vmatpush1.msra.mxu0 %v204
      %243 = vmatprep.subr.mxu0 0.0
      %244 = vmatpush1.msra.mxu0 %v205
      %245 = vmatprep.subr.mxu0 0.0
      %246 = vmatpush1.msra.mxu0 0.0
      %247 = vmatprep.subr.mxu0 0.0
      %248 = vmatpush1.msra.mxu0 0.0
      %249 = vmatprep.subr.mxu0 0.0
      %250 = vmatpush1.msra.mxu0 0.0
      %251 = vmatprep.subr.mxu0 0.0
      %252 = vmatpush1.msra.mxu0 0.0
      %253 = vmatprep.subr.mxu0 0.0
      %254 = vmatpush1.msra.mxu0 0.0
      %255 = vmatprep.subr.mxu0 0.0
      %256 = vmatpush1.msra.mxu0 0.0
      %257 = vmatprep.subr.mxu0 0.0
      %258 = vmatpush1.msra.mxu0 0.0
      %259 = vmatprep.subr.mxu0 0.0
      %260 = vmatpush1.msra.mxu0 0.0
      %261 = vmatprep.subr.mxu0 0.0
      %262 = vmatpush1.msra.mxu0 0.0
      %263 = vmatprep.subr.mxu0 0.0
      %264 = vmatpush1.msra.mxu0 0.0
      %265 = vmatprep.subr.mxu0 0.0
      %266 = vmatpush1.msra.mxu0 0.0
      %267 = vmatprep.subr.mxu0 0.0
      %268 = vmatpush1.msra.mxu0 0.0
      %269 = vmatprep.subr.mxu0 0.0
      %270 = vmatpush1.msra.mxu0 0.0
      %271 = vmatprep.subr.mxu0 0.0
      %272 = vmatpush1.msra.mxu0 0.0
      %273 = vmatprep.subr.mxu0 0.0
      %274 = vmatpush1.msra.mxu0 0.0
      %275 = vmatprep.subr.mxu0 0.0
      %276 = vmatpush1.msra.mxu0 0.0
      %277 = vmatprep.mubr.f32.mxu0 0.0
      %278 = vmatmul.mubr.f32.gmra.mrb[0].mxu0 %v188
      %v279 = vpop.f32.mrb[0].mxu0
      %v280 = vadd.f32 %v211, %v279
      %v281 = vpop.f32.mrb[0].mxu0
      %282 = vmatprep.mubr.f32.mxu0 0.0
      %283 = vmatmul.mubr.f32.gmra.mrb[0].mxu0 %v189
      %v284 = vpop.f32.mrb[0].mxu0
      %v285 = vadd.f32 %v211, %v284
      %v286 = vpop.f32.mrb[0].mxu0
      %287 = vdwg.mxu0
      %vm288 = vcmp.ge.f32.partialorder %v280, 0.0
      %vm289 = vcmp.ge.f32.partialorder %v285, 0.0
      %v290 = vmul.f32 %v280, 0.1
      %v291 = vmul.f32 %v285, 0.1
      %v292 = vsel %vm288, %v280, %v290
      %v293 = vsel %vm289, %v285, %v291
      %294 = vst [vmem:[#allocation2] sm:$0xff] %v292
      %295 = vst [vmem:[#allocation2 + $0x8] sm:$0xff] %v293
      %v296 = vld [vmem:[#allocation8] sm:$0xff]
      %v297 = vld [vmem:[#allocation8 + $0x8] sm:$0xff]
      %v298 = vld [vmem:[#allocation14] sm:$0xff]
      %v299 = vld [vmem:[#allocation14 + $0x8] sm:$0xff]
      %v300 = vld [vmem:[#allocation14 + $0x10] sm:$0xff]
      %v301 = vld [vmem:[#allocation14 + $0x18] sm:$0xff]
      %v302 = vld [vmem:[#allocation14 + $0x20] sm:$0xff]
      %v303 = vld [vmem:[#allocation14 + $0x28] sm:$0xff]
      %v304 = vld [vmem:[#allocation14 + $0x30] sm:$0xff]
      %v305 = vld [vmem:[#allocation14 + $0x38] sm:$0xff]
      %v306 = vld [vmem:[#allocation14 + $0x40] sm:$0xff]
      %v307 = vld [vmem:[#allocation14 + $0x48] sm:$0xff]
      %v308 = vld [vmem:[#allocation14 + $0x50] sm:$0xff]
      %v309 = vld [vmem:[#allocation14 + $0x58] sm:$0xff]
      %v310 = vld [vmem:[#allocation14 + $0x60] sm:$0xff]
      %v311 = vld [vmem:[#allocation14 + $0x68] sm:$0xff]
      %v312 = vld [vmem:[#allocation14 + $0x70] sm:$0xff]
      %v313 = vld [vmem:[#allocation14 + $0x78] sm:$0xff]
      %v314 = vld [vmem:[%s8] sm:$0x1]
      %v316 = vlaneseq
      %v317 = vshrl.u32 %v316, 7
      %v318 = vsub.s32 0, %v317
      %v319 = vrot.slane %v314, %v318
      %321 = vmatprep.subr.mxu0 0.0
      %322 = vmatpush1.msra.mxu0 %v298
      %323 = vmatprep.subr.mxu0 0.0
      %324 = vmatpush1.msra.mxu0 %v299
      %325 = vmatprep.subr.mxu0 0.0
      %326 = vmatpush1.msra.mxu0 %v300
      %327 = vmatprep.subr.mxu0 0.0
      %328 = vmatpush1.msra.mxu0 %v301
      %329 = vmatprep.subr.mxu0 0.0
      %330 = vmatpush1.msra.mxu0 %v302
      %331 = vmatprep.subr.mxu0 0.0
      %332 = vmatpush1.msra.mxu0 %v303
      %333 = vmatprep.subr.mxu0 0.0
      %334 = vmatpush1.msra.mxu0 %v304
      %335 = vmatprep.subr.mxu0 0.0
      %336 = vmatpush1.msra.mxu0 %v305
      %337 = vmatprep.subr.mxu0 0.0
      %338 = vmatpush1.msra.mxu0 %v306
      %339 = vmatprep.subr.mxu0 0.0
      %340 = vmatpush1.msra.mxu0 %v307
      %341 = vmatprep.subr.mxu0 0.0
      %342 = vmatpush1.msra.mxu0 %v308
      %343 = vmatprep.subr.mxu0 0.0
      %344 = vmatpush1.msra.mxu0 %v309
      %345 = vmatprep.subr.mxu0 0.0
      %346 = vmatpush1.msra.mxu0 %v310
      %347 = vmatprep.subr.mxu0 0.0
      %348 = vmatpush1.msra.mxu0 %v311
      %349 = vmatprep.subr.mxu0 0.0
      %350 = vmatpush1.msra.mxu0 %v312
      %351 = vmatprep.subr.mxu0 0.0
      %352 = vmatpush1.msra.mxu0 %v313
      %353 = vmatprep.subr.mxu0 0.0
      %354 = vmatpush1.msra.mxu0 0.0
      %355 = vmatprep.subr.mxu0 0.0
      %356 = vmatpush1.msra.mxu0 0.0
      %357 = vmatprep.subr.mxu0 0.0
      %358 = vmatpush1.msra.mxu0 0.0
      %359 = vmatprep.subr.mxu0 0.0
      %360 = vmatpush1.msra.mxu0 0.0
      %361 = vmatprep.subr.mxu0 0.0
      %362 = vmatpush1.msra.mxu0 0.0
      %363 = vmatprep.subr.mxu0 0.0
      %364 = vmatpush1.msra.mxu0 0.0
      %365 = vmatprep.subr.mxu0 0.0
      %366 = vmatpush1.msra.mxu0 0.0
      %367 = vmatprep.subr.mxu0 0.0
      %368 = vmatpush1.msra.mxu0 0.0
      %369 = vmatprep.subr.mxu0 0.0
      %370 = vmatpush1.msra.mxu0 0.0
      %371 = vmatprep.subr.mxu0 0.0
      %372 = vmatpush1.msra.mxu0 0.0
      %373 = vmatprep.subr.mxu0 0.0
      %374 = vmatpush1.msra.mxu0 0.0
      %375 = vmatprep.subr.mxu0 0.0
      %376 = vmatpush1.msra.mxu0 0.0
      %377 = vmatprep.subr.mxu0 0.0
      %378 = vmatpush1.msra.mxu0 0.0
      %379 = vmatprep.subr.mxu0 0.0
      %380 = vmatpush1.msra.mxu0 0.0
      %381 = vmatprep.subr.mxu0 0.0
      %382 = vmatpush1.msra.mxu0 0.0
      %383 = vmatprep.subr.mxu0 0.0
      %384 = vmatpush1.msra.mxu0 0.0
      %385 = vmatprep.mubr.f32.mxu0 0.0
      %386 = vmatmul.mubr.f32.gmra.mrb[0].mxu0 %v296
      %v387 = vpop.f32.mrb[0].mxu0
      %v388 = vadd.f32 %v319, %v387
      %v389 = vpop.f32.mrb[0].mxu0
      %390 = vmatprep.mubr.f32.mxu0 0.0
      %391 = vmatmul.mubr.f32.gmra.mrb[0].mxu0 %v297
      %v392 = vpop.f32.mrb[0].mxu0
      %v393 = vadd.f32 %v319, %v392
      %v394 = vpop.f32.mrb[0].mxu0
      %395 = vdwg.mxu0
      %vm396 = vcmp.ge.f32.partialorder %v388, 0.0
      %vm397 = vcmp.ge.f32.partialorder %v393, 0.0
      %v398 = vmul.f32 %v388, 0.1
      %v399 = vmul.f32 %v393, 0.1
      %v400 = vsel %vm396, %v388, %v398
      %v401 = vsel %vm397, %v393, %v399
      %402 = vst [vmem:[#allocation3] sm:$0xff] %v400
      %403 = vst [vmem:[#allocation3 + $0x8] sm:$0xff] %v401
      %v404 = vld [vmem:[#allocation10] sm:$0xff]
      %v405 = vld [vmem:[#allocation10 + $0x8] sm:$0xff]
      %v406 = vld [vmem:[#allocation16] sm:$0xff]
      %v407 = vld [vmem:[#allocation16 + $0x8] sm:$0xff]
      %v408 = vld [vmem:[#allocation16 + $0x10] sm:$0xff]
      %v409 = vld [vmem:[#allocation16 + $0x18] sm:$0xff]
      %v410 = vld [vmem:[#allocation16 + $0x20] sm:$0xff]
      %v411 = vld [vmem:[#allocation16 + $0x28] sm:$0xff]
      %v412 = vld [vmem:[#allocation16 + $0x30] sm:$0xff]
      %v413 = vld [vmem:[#allocation16 + $0x38] sm:$0xff]
      %v414 = vld [vmem:[#allocation16 + $0x40] sm:$0xff]
      %v415 = vld [vmem:[#allocation16 + $0x48] sm:$0xff]
      %v416 = vld [vmem:[#allocation16 + $0x50] sm:$0xff]
      %v417 = vld [vmem:[#allocation16 + $0x58] sm:$0xff]
      %v418 = vld [vmem:[#allocation16 + $0x60] sm:$0xff]
      %v419 = vld [vmem:[#allocation16 + $0x68] sm:$0xff]
      %v420 = vld [vmem:[#allocation16 + $0x70] sm:$0xff]
      %v421 = vld [vmem:[#allocation16 + $0x78] sm:$0xff]
      %v422 = vld [vmem:[%s9] sm:$0x1]
      %v424 = vlaneseq
      %v425 = vshrl.u32 %v424, 7
      %v426 = vsub.s32 0, %v425
      %v427 = vrot.slane %v422, %v426
      %429 = vmatprep.subr.mxu0 0.0
      %430 = vmatpush1.msra.mxu0 %v406
      %431 = vmatprep.subr.mxu0 0.0
      %432 = vmatpush1.msra.mxu0 %v407
      %433 = vmatprep.subr.mxu0 0.0
      %434 = vmatpush1.msra.mxu0 %v408
      %435 = vmatprep.subr.mxu0 0.0
      %436 = vmatpush1.msra.mxu0 %v409
      %437 = vmatprep.subr.mxu0 0.0
      %438 = vmatpush1.msra.mxu0 %v410
      %439 = vmatprep.subr.mxu0 0.0
      %440 = vmatpush1.msra.mxu0 %v411
      %441 = vmatprep.subr.mxu0 0.0
      %442 = vmatpush1.msra.mxu0 %v412
      %443 = vmatprep.subr.mxu0 0.0
      %444 = vmatpush1.msra.mxu0 %v413
      %445 = vmatprep.subr.mxu0 0.0
      %446 = vmatpush1.msra.mxu0 %v414
      %447 = vmatprep.subr.mxu0 0.0
      %448 = vmatpush1.msra.mxu0 %v415
      %449 = vmatprep.subr.mxu0 0.0
      %450 = vmatpush1.msra.mxu0 %v416
      %451 = vmatprep.subr.mxu0 0.0
      %452 = vmatpush1.msra.mxu0 %v417
      %453 = vmatprep.subr.mxu0 0.0
      %454 = vmatpush1.msra.mxu0 %v418
      %455 = vmatprep.subr.mxu0 0.0
      %456 = vmatpush1.msra.mxu0 %v419
      %457 = vmatprep.subr.mxu0 0.0
      %458 = vmatpush1.msra.mxu0 %v420
      %459 = vmatprep.subr.mxu0 0.0
      %460 = vmatpush1.msra.mxu0 %v421
      %461 = vmatprep.subr.mxu0 0.0
      %462 = vmatpush1.msra.mxu0 0.0
      %463 = vmatprep.subr.mxu0 0.0
      %464 = vmatpush1.msra.mxu0 0.0
      %465 = vmatprep.subr.mxu0 0.0
      %466 = vmatpush1.msra.mxu0 0.0
      %467 = vmatprep.subr.mxu0 0.0
      %468 = vmatpush1.msra.mxu0 0.0
      %469 = vmatprep.subr.mxu0 0.0
      %470 = vmatpush1.msra.mxu0 0.0
      %471 = vmatprep.subr.mxu0 0.0
      %472 = vmatpush1.msra.mxu0 0.0
      %473 = vmatprep.subr.mxu0 0.0
      %474 = vmatpush1.msra.mxu0 0.0
      %475 = vmatprep.subr.mxu0 0.0
      %476 = vmatpush1.msra.mxu0 0.0
      %477 = vmatprep.subr.mxu0 0.0
      %478 = vmatpush1.msra.mxu0 0.0
      %479 = vmatprep.subr.mxu0 0.0
      %480 = vmatpush1.msra.mxu0 0.0
      %481 = vmatprep.subr.mxu0 0.0
      %482 = vmatpush1.msra.mxu0 0.0
      %483 = vmatprep.subr.mxu0 0.0
      %484 = vmatpush1.msra.mxu0 0.0
      %485 = vmatprep.subr.mxu0 0.0
      %486 = vmatpush1.msra.mxu0 0.0
      %487 = vmatprep.subr.mxu0 0.0
      %488 = vmatpush1.msra.mxu0 0.0
      %489 = vmatprep.subr.mxu0 0.0
      %490 = vmatpush1.msra.mxu0 0.0
      %491 = vmatprep.subr.mxu0 0.0
      %492 = vmatpush1.msra.mxu0 0.0
      %493 = vmatprep.mubr.f32.mxu0 0.0
      %494 = vmatmul.mubr.f32.gmra.mrb[0].mxu0 %v404
      %v495 = vpop.f32.mrb[0].mxu0
      %v496 = vadd.f32 %v427, %v495
      %v497 = vpop.f32.mrb[0].mxu0
      %498 = vmatprep.mubr.f32.mxu0 0.0
      %499 = vmatmul.mubr.f32.gmra.mrb[0].mxu0 %v405
      %v500 = vpop.f32.mrb[0].mxu0
      %v501 = vadd.f32 %v427, %v500
      %v502 = vpop.f32.mrb[0].mxu0
      %503 = vdwg.mxu0
      %vm504 = vcmp.ge.f32.partialorder %v496, 0.0
      %vm505 = vcmp.ge.f32.partialorder %v501, 0.0
      %v506 = vmul.f32 %v496, 0.1
      %v507 = vmul.f32 %v501, 0.1
      %v508 = vsel %vm504, %v496, %v506
      %v509 = vsel %vm505, %v501, %v507
      %510 = vst [vmem:[#allocation4] sm:$0xff] %v508
      %511 = vst [vmem:[#allocation4 + $0x8] sm:$0xff] %v509
    $region101: #{tpu_custom_call.1} parent=1 // pred_fallthru
      _
    %v512 = vld [vmem:[#allocation2] sm:$0xff]
    %v513 = vld [vmem:[#allocation2 + $0x8] sm:$0xff]
    %v514 = vld [vmem:[#allocation17] sm:$0xff]
    %v515 = vld [vmem:[#allocation17 + $0x8] sm:$0xff]
    %v516 = vld [vmem:[#allocation17 + $0x10] sm:$0xff]
    %v517 = vld [vmem:[#allocation17 + $0x18] sm:$0xff]
    %v518 = vld [vmem:[#allocation17 + $0x20] sm:$0xff]
    %v519 = vld [vmem:[#allocation17 + $0x28] sm:$0xff]
    %v520 = vld [vmem:[#allocation17 + $0x30] sm:$0xff]
    %v521 = vld [vmem:[#allocation17 + $0x38] sm:$0xff]
    %v522 = vld [vmem:[#allocation17 + $0x40] sm:$0xff]
    %v523 = vld [vmem:[#allocation17 + $0x48] sm:$0xff]
    %v524 = vld [vmem:[#allocation17 + $0x50] sm:$0xff]
    %v525 = vld [vmem:[#allocation17 + $0x58] sm:$0xff]
    %v526 = vld [vmem:[#allocation17 + $0x60] sm:$0xff]
    %v527 = vld [vmem:[#allocation17 + $0x68] sm:$0xff]
    %v528 = vld [vmem:[#allocation17 + $0x70] sm:$0xff]
    %v529 = vld [vmem:[#allocation17 + $0x78] sm:$0xff]
    %v530 = vld [vmem:[#allocation3] sm:$0xff]
    %v531 = vld [vmem:[#allocation3 + $0x8] sm:$0xff]
    %v532 = vld [vmem:[#allocation19] sm:$0xff]
    %v533 = vld [vmem:[#allocation19 + $0x8] sm:$0xff]
    %v534 = vld [vmem:[#allocation19 + $0x10] sm:$0xff]
    %v535 = vld [vmem:[#allocation19 + $0x18] sm:$0xff]
    %v536 = vld [vmem:[#allocation19 + $0x20] sm:$0xff]
    %v537 = vld [vmem:[#allocation19 + $0x28] sm:$0xff]
    %v538 = vld [vmem:[#allocation19 + $0x30] sm:$0xff]
    %v539 = vld [vmem:[#allocation19 + $0x38] sm:$0xff]
    %v540 = vld [vmem:[#allocation19 + $0x40] sm:$0xff]
    %v541 = vld [vmem:[#allocation19 + $0x48] sm:$0xff]
    %v542 = vld [vmem:[#allocation19 + $0x50] sm:$0xff]
    %v543 = vld [vmem:[#allocation19 + $0x58] sm:$0xff]
    %v544 = vld [vmem:[#allocation19 + $0x60] sm:$0xff]
    %v545 = vld [vmem:[#allocation19 + $0x68] sm:$0xff]
    %v546 = vld [vmem:[#allocation19 + $0x70] sm:$0xff]
    %v547 = vld [vmem:[#allocation19 + $0x78] sm:$0xff]
    %548 = vmatprep.subr.mxu0 0.0
    %549 = vmatpush1.msra.mxu0 %v532
    %550 = vmatprep.subr.mxu0 0.0
    %551 = vmatpush1.msra.mxu0 %v533
    %552 = vmatprep.subr.mxu0 0.0
    %553 = vmatpush1.msra.mxu0 %v534
    %554 = vmatprep.subr.mxu0 0.0
    %555 = vmatpush1.msra.mxu0 %v535
    %556 = vmatprep.subr.mxu0 0.0
    %557 = vmatpush1.msra.mxu0 %v536
    %558 = vmatprep.subr.mxu0 0.0
    %559 = vmatpush1.msra.mxu0 %v537
    %560 = vmatprep.subr.mxu0 0.0
    %561 = vmatpush1.msra.mxu0 %v538
    %562 = vmatprep.subr.mxu0 0.0
    %563 = vmatpush1.msra.mxu0 %v539
    %564 = vmatprep.subr.mxu0 0.0
    %565 = vmatpush1.msra.mxu0 %v540
    %566 = vmatprep.subr.mxu0 0.0
    %567 = vmatpush1.msra.mxu0 %v541
    %568 = vmatprep.subr.mxu0 0.0
    %569 = vmatpush1.msra.mxu0 %v542
    %570 = vmatprep.subr.mxu0 0.0
    %571 = vmatpush1.msra.mxu0 %v543
    %572 = vmatprep.subr.mxu0 0.0
    %573 = vmatpush1.msra.mxu0 %v544
    %574 = vmatprep.subr.mxu0 0.0
    %575 = vmatpush1.msra.mxu0 %v545
    %576 = vmatprep.subr.mxu0 0.0
    %577 = vmatpush1.msra.mxu0 %v546
    %578 = vmatprep.subr.mxu0 0.0
    %579 = vmatpush1.msra.mxu0 %v547
    %580 = vmatprep.subr.mxu0 0.0
    %581 = vmatpush1.msra.mxu0 0.0
    %582 = vmatprep.subr.mxu0 0.0
    %583 = vmatpush1.msra.mxu0 0.0
    %584 = vmatprep.subr.mxu0 0.0
    %585 = vmatpush1.msra.mxu0 0.0
    %586 = vmatprep.subr.mxu0 0.0
    %587 = vmatpush1.msra.mxu0 0.0
    %588 = vmatprep.subr.mxu0 0.0
    %589 = vmatpush1.msra.mxu0 0.0
    %590 = vmatprep.subr.mxu0 0.0
    %591 = vmatpush1.msra.mxu0 0.0
    %592 = vmatprep.subr.mxu0 0.0
    %593 = vmatpush1.msra.mxu0 0.0
    %594 = vmatprep.subr.mxu0 0.0
    %595 = vmatpush1.msra.mxu0 0.0
    %596 = vmatprep.subr.mxu0 0.0
    %597 = vmatpush1.msra.mxu0 0.0
    %598 = vmatprep.subr.mxu0 0.0
    %599 = vmatpush1.msra.mxu0 0.0
    %600 = vmatprep.subr.mxu0 0.0
    %601 = vmatpush1.msra.mxu0 0.0
    %602 = vmatprep.subr.mxu0 0.0
    %603 = vmatpush1.msra.mxu0 0.0
    %604 = vmatprep.subr.mxu0 0.0
    %605 = vmatpush1.msra.mxu0 0.0
    %606 = vmatprep.subr.mxu0 0.0
    %607 = vmatpush1.msra.mxu0 0.0
    %608 = vmatprep.subr.mxu0 0.0
    %609 = vmatpush1.msra.mxu0 0.0
    %610 = vmatprep.subr.mxu0 0.0
    %611 = vmatpush1.msra.mxu0 0.0
    %612 = vmatprep.mubr.f32.mxu0 0.0
    %613 = vmatmul.mubr.f32.gmra.mrb[0].mxu0 %v530
    %v614 = vpop.f32.mrb[0].mxu0
    %v615 = vadd.f32 0.0, %v614
    %v616 = vpop.f32.mrb[0].mxu0
    %617 = vmatprep.mubr.f32.mxu0 0.0
    %618 = vmatmul.mubr.f32.gmra.mrb[0].mxu0 %v531
    %v619 = vpop.f32.mrb[0].mxu0
    %v620 = vadd.f32 0.0, %v619
    %v621 = vpop.f32.mrb[0].mxu0
    %622 = vdwg.mxu0
    %623 = vmatprep.subr.mxu0 0.0
    %624 = vmatpush1.msra.mxu0 %v514
    %625 = vmatprep.subr.mxu0 0.0
    %626 = vmatpush1.msra.mxu0 %v515
    %627 = vmatprep.subr.mxu0 0.0
    %628 = vmatpush1.msra.mxu0 %v516
    %629 = vmatprep.subr.mxu0 0.0
    %630 = vmatpush1.msra.mxu0 %v517
    %631 = vmatprep.subr.mxu0 0.0
    %632 = vmatpush1.msra.mxu0 %v518
    %633 = vmatprep.subr.mxu0 0.0
    %634 = vmatpush1.msra.mxu0 %v519
    %635 = vmatprep.subr.mxu0 0.0
    %636 = vmatpush1.msra.mxu0 %v520
    %637 = vmatprep.subr.mxu0 0.0
    %638 = vmatpush1.msra.mxu0 %v521
    %639 = vmatprep.subr.mxu0 0.0
    %640 = vmatpush1.msra.mxu0 %v522
    %641 = vmatprep.subr.mxu0 0.0
    %642 = vmatpush1.msra.mxu0 %v523
    %643 = vmatprep.subr.mxu0 0.0
    %644 = vmatpush1.msra.mxu0 %v524
    %645 = vmatprep.subr.mxu0 0.0
    %646 = vmatpush1.msra.mxu0 %v525
    %647 = vmatprep.subr.mxu0 0.0
    %648 = vmatpush1.msra.mxu0 %v526
    %649 = vmatprep.subr.mxu0 0.0
    %650 = vmatpush1.msra.mxu0 %v527
    %651 = vmatprep.subr.mxu0 0.0
    %652 = vmatpush1.msra.mxu0 %v528
    %653 = vmatprep.subr.mxu0 0.0
    %654 = vmatpush1.msra.mxu0 %v529
    %655 = vmatprep.subr.mxu0 0.0
    %656 = vmatpush1.msra.mxu0 0.0
    %657 = vmatprep.subr.mxu0 0.0
    %658 = vmatpush1.msra.mxu0 0.0
    %659 = vmatprep.subr.mxu0 0.0
    %660 = vmatpush1.msra.mxu0 0.0
    %661 = vmatprep.subr.mxu0 0.0
    %662 = vmatpush1.msra.mxu0 0.0
    %663 = vmatprep.subr.mxu0 0.0
    %664 = vmatpush1.msra.mxu0 0.0
    %665 = vmatprep.subr.mxu0 0.0
    %666 = vmatpush1.msra.mxu0 0.0
    %667 = vmatprep.subr.mxu0 0.0
    %668 = vmatpush1.msra.mxu0 0.0
    %669 = vmatprep.subr.mxu0 0.0
    %670 = vmatpush1.msra.mxu0 0.0
    %671 = vmatprep.subr.mxu0 0.0
    %672 = vmatpush1.msra.mxu0 0.0
    %673 = vmatprep.subr.mxu0 0.0
    %674 = vmatpush1.msra.mxu0 0.0
    %675 = vmatprep.subr.mxu0 0.0
    %676 = vmatpush1.msra.mxu0 0.0
    %677 = vmatprep.subr.mxu0 0.0
    %678 = vmatpush1.msra.mxu0 0.0
    %679 = vmatprep.subr.mxu0 0.0
    %680 = vmatpush1.msra.mxu0 0.0
    %681 = vmatprep.subr.mxu0 0.0
    %682 = vmatpush1.msra.mxu0 0.0
    %683 = vmatprep.subr.mxu0 0.0
    %684 = vmatpush1.msra.mxu0 0.0
    %685 = vmatprep.subr.mxu0 0.0
    %686 = vmatpush1.msra.mxu0 0.0
    %687 = vmatprep.mubr.f32.mxu0 0.0
    %688 = vmatmul.mubr.f32.gmra.mrb[0].mxu0 %v512
    %v689 = vpop.f32.mrb[0].mxu0
    %v690 = vadd.f32 %v615, %v689
    %v691 = vpop.f32.mrb[0].mxu0
    %692 = vmatprep.mubr.f32.mxu0 0.0
    %693 = vmatmul.mubr.f32.gmra.mrb[0].mxu0 %v513
    %v694 = vpop.f32.mrb[0].mxu0
    %v695 = vadd.f32 %v620, %v694
    %v696 = vpop.f32.mrb[0].mxu0
    %697 = vdwg.mxu0
    %v698 = vld [vmem:[#allocation4] sm:$0xff]
    %v699 = vld [vmem:[#allocation4 + $0x8] sm:$0xff]
    %v700 = vld [vmem:[#allocation20] sm:$0xff]
    %v701 = vld [vmem:[#allocation20 + $0x8] sm:$0xff]
    %v702 = vld [vmem:[#allocation20 + $0x10] sm:$0xff]
    %v703 = vld [vmem:[#allocation20 + $0x18] sm:$0xff]
    %v704 = vld [vmem:[#allocation20 + $0x20] sm:$0xff]
    %v705 = vld [vmem:[#allocation20 + $0x28] sm:$0xff]
    %v706 = vld [vmem:[#allocation20 + $0x30] sm:$0xff]
    %v707 = vld [vmem:[#allocation20 + $0x38] sm:$0xff]
    %v708 = vld [vmem:[#allocation20 + $0x40] sm:$0xff]
    %v709 = vld [vmem:[#allocation20 + $0x48] sm:$0xff]
    %v710 = vld [vmem:[#allocation20 + $0x50] sm:$0xff]
    %v711 = vld [vmem:[#allocation20 + $0x58] sm:$0xff]
    %v712 = vld [vmem:[#allocation20 + $0x60] sm:$0xff]
    %v713 = vld [vmem:[#allocation20 + $0x68] sm:$0xff]
    %v714 = vld [vmem:[#allocation20 + $0x70] sm:$0xff]
    %v715 = vld [vmem:[#allocation20 + $0x78] sm:$0xff]
    %716 = vmatprep.subr.mxu0 0.0
    %717 = vmatpush1.msra.mxu0 %v700
    %718 = vmatprep.subr.mxu0 0.0
    %719 = vmatpush1.msra.mxu0 %v701
    %720 = vmatprep.subr.mxu0 0.0
    %721 = vmatpush1.msra.mxu0 %v702
    %722 = vmatprep.subr.mxu0 0.0
    %723 = vmatpush1.msra.mxu0 %v703
    %724 = vmatprep.subr.mxu0 0.0
    %725 = vmatpush1.msra.mxu0 %v704
    %726 = vmatprep.subr.mxu0 0.0
    %727 = vmatpush1.msra.mxu0 %v705
    %728 = vmatprep.subr.mxu0 0.0
    %729 = vmatpush1.msra.mxu0 %v706
    %730 = vmatprep.subr.mxu0 0.0
    %731 = vmatpush1.msra.mxu0 %v707
    %732 = vmatprep.subr.mxu0 0.0
    %733 = vmatpush1.msra.mxu0 %v708
    %734 = vmatprep.subr.mxu0 0.0
    %735 = vmatpush1.msra.mxu0 %v709
    %736 = vmatprep.subr.mxu0 0.0
    %737 = vmatpush1.msra.mxu0 %v710
    %738 = vmatprep.subr.mxu0 0.0
    %739 = vmatpush1.msra.mxu0 %v711
    %740 = vmatprep.subr.mxu0 0.0
    %741 = vmatpush1.msra.mxu0 %v712
    %742 = vmatprep.subr.mxu0 0.0
    %743 = vmatpush1.msra.mxu0 %v713
    %744 = vmatprep.subr.mxu0 0.0
    %745 = vmatpush1.msra.mxu0 %v714
    %746 = vmatprep.subr.mxu0 0.0
    %747 = vmatpush1.msra.mxu0 %v715
    %748 = vmatprep.subr.mxu0 0.0
    %749 = vmatpush1.msra.mxu0 0.0
    %750 = vmatprep.subr.mxu0 0.0
    %751 = vmatpush1.msra.mxu0 0.0
    %752 = vmatprep.subr.mxu0 0.0
    %753 = vmatpush1.msra.mxu0 0.0
    %754 = vmatprep.subr.mxu0 0.0
    %755 = vmatpush1.msra.mxu0 0.0
    %756 = vmatprep.subr.mxu0 0.0
    %757 = vmatpush1.msra.mxu0 0.0
    %758 = vmatprep.subr.mxu0 0.0
    %759 = vmatpush1.msra.mxu0 0.0
    %760 = vmatprep.subr.mxu0 0.0
    %761 = vmatpush1.msra.mxu0 0.0
    %762 = vmatprep.subr.mxu0 0.0
    %763 = vmatpush1.msra.mxu0 0.0
    %764 = vmatprep.subr.mxu0 0.0
    %765 = vmatpush1.msra.mxu0 0.0
    %766 = vmatprep.subr.mxu0 0.0
    %767 = vmatpush1.msra.mxu0 0.0
    %768 = vmatprep.subr.mxu0 0.0
    %769 = vmatpush1.msra.mxu0 0.0
    %770 = vmatprep.subr.mxu0 0.0
    %771 = vmatpush1.msra.mxu0 0.0
    %772 = vmatprep.subr.mxu0 0.0
    %773 = vmatpush1.msra.mxu0 0.0
    %774 = vmatprep.subr.mxu0 0.0
    %775 = vmatpush1.msra.mxu0 0.0
    %776 = vmatprep.subr.mxu0 0.0
    %777 = vmatpush1.msra.mxu0 0.0
    %778 = vmatprep.subr.mxu0 0.0
    %779 = vmatpush1.msra.mxu0 0.0
    %780 = vmatprep.mubr.f32.mxu0 0.0
    %781 = vmatmul.mubr.f32.gmra.mrb[0].mxu0 %v698
    %v782 = vpop.f32.mrb[0].mxu0
    %v783 = vadd.f32 0.0, %v782
    %v784 = vpop.f32.mrb[0].mxu0
    %785 = vmatprep.mubr.f32.mxu0 0.0
    %786 = vmatmul.mubr.f32.gmra.mrb[0].mxu0 %v699
    %v787 = vpop.f32.mrb[0].mxu0
    %v788 = vadd.f32 0.0, %v787
    %v789 = vpop.f32.mrb[0].mxu0
    %790 = vdwg.mxu0
    %v791 = vadd.f32 %v690, %v783
    %v792 = vadd.f32 %v695, %v788
    %v793 = vld [vmem:[%s13] sm:$0x1]
    %v795 = vlaneseq
    %v796 = vshrl.u32 %v795, 7
    %v797 = vsub.s32 0, %v796
    %v798 = vrot.slane %v793, %v797
    %v800 = vadd.f32 %v791, %v798
    %v801 = vadd.f32 %v792, %v798
    %v802 = vld [vmem:[#allocation11] sm:$0xff]
    %v803 = vld [vmem:[#allocation11 + $0x8] sm:$0xff]
    %v804 = vadd.f32 %v800, %v802
    %v805 = vadd.f32 %v801, %v803
    %806 = vst [vmem:[#allocation22] sm:$0xff] %v804
    %807 = vst [vmem:[#allocation22 + $0x8] sm:$0xff] %v805
    // Predicated region
    $region102: #{tpu_custom_call.1} parent=1 // pred_check
      _
    $region103: #{tpu_custom_call.1} parent=1 // pred_check_branch
      %809 = sbr.rel (0) target = $region105
    $region104: #{tpu_custom_call.1} parent=1 // pred_region
      %s811 = ssub.s32 256, 256
      %812 = vsyncadd [#allocation7], %s811
      %s813 = sshll.u32 [#allocation22], 4
      %s814 = int_to_ptr.vmem [resolvable:$true] %s813
      %819 = dma.vmem_to_hbm [thread:$0]  %s814, 256, %s14, [#allocation7], 128, 128, 8
    $region105: #{tpu_custom_call.1} parent=1 // pred_fallthru
      _
    // Predicated region
    $region106: #{tpu_custom_call.1} parent=1 // pred_check
      _
    $region107: #{tpu_custom_call.1} parent=1 // pred_check_branch
      %821 = sbr.rel (0) target = $region109
    $region108: #{tpu_custom_call.1} parent=1 // pred_region
      %822 = dma.done [#allocation7], 256
    $region109: #{tpu_custom_call.1} parent=1 // pred_fallthru
      _
    %823 = vsyncpa [#allocation6], 1
    %824 = vsyncpa [#allocation9], 1
    %825 = vsyncpa [#allocation12], 1
    %826 = vsyncpa [#allocation15], 1
    %827 = vsyncpa [#allocation18], 1
    %828 = vsyncpa [#allocation21], 1
    %829 = vsyncpa [#allocation7], 1

</llo_original>
